<compile_context>
chip_gen: v7x
topology: tpu7x:2x2x1
jax: 0.10.0
libtpu: 0.0.40
codegen_flags: <defaults>
</compile_context>

<pallas_src>
import functools
import math

import jax
import jax.numpy as jnp
from jax.experimental import pallas as pl
from jax.experimental.pallas import tpu as pltpu


def _mha_kernel(xq_ref, xk_ref, xv_ref,
                wq_ref, bq_ref, wk_ref, bk_ref, wv_ref, bv_ref,
                wo_ref, bo_ref,
                o_ref, *, num_heads: int, d_k: int):
    """One batch element per grid step.  VMEM views:
       xq/xk/xv: (S, D)   w*: (D, D)   b*: (1, D)   o: (S, D)
    The entire MHA forward for this batch element runs in one grid step so the
    ~0.35us/step overhead is amortized over real MXU work (no tiny elementwise
    launches), and the projection weights stay resident across steps.
    """
    scale = 1.0 / math.sqrt(d_k)

    xq = xq_ref[...]
    xk = xk_ref[...]
    xv = xv_ref[...]

    # Q/K/V projections on the MXU with f32 accumulation; bias broadcast (1,D)->(S,D).
    q = jnp.dot(xq, wq_ref[...], preferred_element_type=jnp.float32) + bq_ref[...]
    k = jnp.dot(xk, wk_ref[...], preferred_element_type=jnp.float32) + bk_ref[...]
    v = jnp.dot(xv, wv_ref[...], preferred_element_type=jnp.float32) + bv_ref[...]

    # Per-head scaled dot-product attention.  Heads are *static* lane slices of
    # the projected activations, so no reshape/transpose on the minor dims is
    # needed (the Python loop over num_heads is unrolled at trace time).
    head_outs = []
    for h in range(num_heads):
        lo = h * d_k
        qh = q[:, lo:lo + d_k]          # (S, d_k)
        kh = k[:, lo:lo + d_k]          # (S, d_k)
        vh = v[:, lo:lo + d_k]          # (S, d_k)

        # scores = qh @ kh^T / sqrt(d_k) — contraction on d_k, no explicit transpose.
        s = jax.lax.dot_general(qh, kh, (((1,), (1,)), ((), ())),
                                preferred_element_type=jnp.float32) * scale
        # TODO(synk): mask support (scores = where(mask==0, -1e9, scores)); the
        # reference default is mask=None, which is what this kernel implements.
        s = s - jnp.max(s, axis=-1, keepdims=True)
        p = jnp.exp(s)
        p = p / jnp.sum(p, axis=-1, keepdims=True)
        # TODO(synk): training-mode dropout (p=0.1) on the attention probs; eval
        # mode (identity) is implemented here.
        head_outs.append(jnp.dot(p, vh, preferred_element_type=jnp.float32))

    ctx = jnp.concatenate(head_outs, axis=-1)            # (S, D) — heads concatenated
    out = jnp.dot(ctx, wo_ref[...], preferred_element_type=jnp.float32) + bo_ref[...]
    o_ref[...] = out.astype(o_ref.dtype)


def multi_headed_attention(query, key, value, params, *, num_heads):
    """query/key/value: (B, S, D) f32.  params = (wq, bq, wk, bk, wv, bv, wo, bo)."""
    B, S, D = query.shape
    assert D % num_heads == 0, "d_model must be divisible by num_heads"
    d_k = D // num_heads
    wq, bq, wk, bk, wv, bv, wo, bo = params

    # Keep biases 2-D (1, D) so they get a lane-major VMEM layout.
    bq2, bk2, bv2, bo2 = (b.reshape(1, D) for b in (bq, bk, bv, bo))

    kernel = functools.partial(_mha_kernel, num_heads=num_heads, d_k=d_k)

    # Activations: leading batch dim squeezed out of the kernel view (2-D body,
    # no in-kernel broadcast / [0] indexing).  Blocks are full (S, D) extents.
    x_spec = pl.BlockSpec((None, S, D), lambda b: (b, 0, 0))
    # Weights / biases: constant index map -> resident across grid steps (no re-DMA).
    w_spec = pl.BlockSpec((D, D), lambda b: (0, 0))
    b_spec = pl.BlockSpec((1, D), lambda b: (0, 0))

    return pl.pallas_call(
        kernel,
        out_shape=jax.ShapeDtypeStruct((B, S, D), query.dtype),
        grid_spec=pltpu.PrefetchScalarGridSpec(
            num_scalar_prefetch=0,
            grid=(B,),                          # one grid step per batch element
            in_specs=[x_spec, x_spec, x_spec,
                      w_spec, b_spec,           # wq, bq
                      w_spec, b_spec,           # wk, bk
                      w_spec, b_spec,           # wv, bv
                      w_spec, b_spec],          # wo, bo
            out_specs=pl.BlockSpec((None, S, D), lambda b: (b, 0, 0)),
        ),
        compiler_params=pltpu.CompilerParams(
            # Batch axis is independent -> shards across v7x's 2 TensorCores;
            # neutral on single-TC v5e/v6e.
            dimension_semantics=("parallel",),
        ),
    )(query, key, value, wq, bq2, wk, bk2, wv, bv2, wo, bo2)


def _mha_reference(query, key, value, params, *, num_heads):
    """Pure-JAX reference mirroring the PyTorch module (mask=None, eval dropout)."""
    B, S, D = query.shape
    d_k = D // num_heads
    wq, bq, wk, bk, wv, bv, wo, bo = params

    def project(x, w, b):
        y = x @ w + b
        return y.reshape(B, S, num_heads, d_k).transpose(0, 2, 1, 3)

    q = project(query, wq, bq)
    k = project(key, wk, bk)
    v = project(value, wv, bv)
    s = jnp.einsum("bhqd,bhkd->bhqk", q, k) / math.sqrt(d_k)
    p = jax.nn.softmax(s, axis=-1)
    ctx = jnp.einsum("bhqk,bhkd->bhqd", p, v)
    ctx = ctx.transpose(0, 2, 1, 3).reshape(B, S, D)
    return ctx @ wo + bo


if __name__ == "__main__":
    batch, seq, d_model, num_heads = 2, 8, 64, 4

    root = jax.random.PRNGKey(0)
    keys = jax.random.split(root, 11)
    w_scale = 1.0 / math.sqrt(d_model)

    query = jax.random.normal(keys[0], (batch, seq, d_model), jnp.float32)
    key_x = jax.random.normal(keys[1], (batch, seq, d_model), jnp.float32)
    value = jax.random.normal(keys[2], (batch, seq, d_model), jnp.float32)

    params = (
        jax.random.normal(keys[3], (d_model, d_model), jnp.float32) * w_scale,  # wq
        jax.random.normal(keys[4], (d_model,), jnp.float32) * 0.1,              # bq
        jax.random.normal(keys[5], (d_model, d_model), jnp.float32) * w_scale,  # wk
        jax.random.normal(keys[6], (d_model,), jnp.float32) * 0.1,              # bk
        jax.random.normal(keys[7], (d_model, d_model), jnp.float32) * w_scale,  # wv
        jax.random.normal(keys[8], (d_model,), jnp.float32) * 0.1,              # bv
        jax.random.normal(keys[9], (d_model, d_model), jnp.float32) * w_scale,  # wo
        jax.random.normal(keys[10], (d_model,), jnp.float32) * 0.1,             # bo
    )

    out = multi_headed_attention(query, key_x, value, params, num_heads=num_heads)
    jax.block_until_ready(out)

    ref = _mha_reference(query, key_x, value, params, num_heads=num_heads)
    assert out.shape == (batch, seq, d_model)
    err = jnp.max(jnp.abs(out - ref))
    assert jnp.allclose(out, ref, atol=2e-3, rtol=2e-3), f"mismatch vs reference, max abs err={err}"

    print("KERNEL_OK")
</pallas_src>

<mosaic_0001>
module attributes {stable_mosaic.version = 11 : i64} {
  func.func @_mha_kernel(%arg0: i32, %arg1: memref<1x8x64xf32, #tpu.memory_space<vmem>>, %arg2: memref<1x8x64xf32, #tpu.memory_space<vmem>>, %arg3: memref<1x8x64xf32, #tpu.memory_space<vmem>>, %arg4: memref<64x64xf32, #tpu.memory_space<vmem>>, %arg5: memref<1x64xf32, #tpu.memory_space<vmem>>, %arg6: memref<64x64xf32, #tpu.memory_space<vmem>>, %arg7: memref<1x64xf32, #tpu.memory_space<vmem>>, %arg8: memref<64x64xf32, #tpu.memory_space<vmem>>, %arg9: memref<1x64xf32, #tpu.memory_space<vmem>>, %arg10: memref<64x64xf32, #tpu.memory_space<vmem>>, %arg11: memref<1x64xf32, #tpu.memory_space<vmem>>, %arg12: memref<1x8x64xf32, #tpu.memory_space<vmem>>) attributes {dimension_semantics = [#tpu.dimension_semantics<parallel>], iteration_bounds = array<i64: 2>, scalar_prefetch = 0 : i64, scratch_operands = 0 : i64, tpu.core_type = #tpu.core_type<tc>, window_params = [{transform_indices = @transform_0, window_bounds = array<i64: 1, 8, 64>}, {transform_indices = @transform_1, window_bounds = array<i64: 1, 8, 64>}, {transform_indices = @transform_2, window_bounds = array<i64: 1, 8, 64>}, {pipeline_mode = #tpu.pipeline_mode<synchronous>, transform_indices = @transform_3, window_bounds = array<i64: 64, 64>}, {pipeline_mode = #tpu.pipeline_mode<synchronous>, transform_indices = @transform_4, window_bounds = array<i64: 1, 64>}, {pipeline_mode = #tpu.pipeline_mode<synchronous>, transform_indices = @transform_5, window_bounds = array<i64: 64, 64>}, {pipeline_mode = #tpu.pipeline_mode<synchronous>, transform_indices = @transform_6, window_bounds = array<i64: 1, 64>}, {pipeline_mode = #tpu.pipeline_mode<synchronous>, transform_indices = @transform_7, window_bounds = array<i64: 64, 64>}, {pipeline_mode = #tpu.pipeline_mode<synchronous>, transform_indices = @transform_8, window_bounds = array<i64: 1, 64>}, {pipeline_mode = #tpu.pipeline_mode<synchronous>, transform_indices = @transform_9, window_bounds = array<i64: 64, 64>}, {pipeline_mode = #tpu.pipeline_mode<synchronous>, transform_indices = @transform_10, window_bounds = array<i64: 1, 64>}, {transform_indices = @transform_11, window_bounds = array<i64: 1, 8, 64>}]} {
    %c0 = arith.constant 0 : index
    %c0_0 = arith.constant 0 : index
    %c0_1 = arith.constant 0 : index
    %0 = vector.load %arg1[%c0, %c0_0, %c0_1] : memref<1x8x64xf32, #tpu.memory_space<vmem>>, vector<1x8x64xf32>
    %1 = vector.shape_cast %0 : vector<1x8x64xf32> to vector<8x64xf32>
    %c0_2 = arith.constant 0 : index
    %c0_3 = arith.constant 0 : index
    %c0_4 = arith.constant 0 : index
    %2 = vector.load %arg2[%c0_2, %c0_3, %c0_4] : memref<1x8x64xf32, #tpu.memory_space<vmem>>, vector<1x8x64xf32>
    %3 = vector.shape_cast %2 : vector<1x8x64xf32> to vector<8x64xf32>
    %c0_5 = arith.constant 0 : index
    %c0_6 = arith.constant 0 : index
    %c0_7 = arith.constant 0 : index
    %4 = vector.load %arg3[%c0_5, %c0_6, %c0_7] : memref<1x8x64xf32, #tpu.memory_space<vmem>>, vector<1x8x64xf32>
    %5 = vector.shape_cast %4 : vector<1x8x64xf32> to vector<8x64xf32>
    %c0_8 = arith.constant 0 : index
    %c0_9 = arith.constant 0 : index
    %6 = vector.load %arg4[%c0_8, %c0_9] : memref<64x64xf32, #tpu.memory_space<vmem>>, vector<64x64xf32>
    %cst = arith.constant dense<0.000000e+00> : vector<8x64xf32>
    %7 = tpu.matmul %1, %6, %cst {dimension_numbers = #tpu.dot_dimension_numbers<[1], [0], [0], [1], [0, 0, 1, 1], [], []>} : vector<8x64xf32>, vector<64x64xf32>, vector<8x64xf32> -> vector<8x64xf32>
    %c0_10 = arith.constant 0 : index
    %c0_11 = arith.constant 0 : index
    %8 = vector.load %arg5[%c0_10, %c0_11] : memref<1x64xf32, #tpu.memory_space<vmem>>, vector<1x64xf32>
    %9 = vector.broadcast %8 : vector<1x64xf32> to vector<8x64xf32>
    %10 = arith.addf %7, %9 : vector<8x64xf32>
    %c0_12 = arith.constant 0 : index
    %c0_13 = arith.constant 0 : index
    %11 = vector.load %arg6[%c0_12, %c0_13] : memref<64x64xf32, #tpu.memory_space<vmem>>, vector<64x64xf32>
    %cst_14 = arith.constant dense<0.000000e+00> : vector<8x64xf32>
    %12 = tpu.matmul %3, %11, %cst_14 {dimension_numbers = #tpu.dot_dimension_numbers<[1], [0], [0], [1], [0, 0, 1, 1], [], []>} : vector<8x64xf32>, vector<64x64xf32>, vector<8x64xf32> -> vector<8x64xf32>
    %c0_15 = arith.constant 0 : index
    %c0_16 = arith.constant 0 : index
    %13 = vector.load %arg7[%c0_15, %c0_16] : memref<1x64xf32, #tpu.memory_space<vmem>>, vector<1x64xf32>
    %14 = vector.broadcast %13 : vector<1x64xf32> to vector<8x64xf32>
    %15 = arith.addf %12, %14 : vector<8x64xf32>
    %c0_17 = arith.constant 0 : index
    %c0_18 = arith.constant 0 : index
    %16 = vector.load %arg8[%c0_17, %c0_18] : memref<64x64xf32, #tpu.memory_space<vmem>>, vector<64x64xf32>
    %cst_19 = arith.constant dense<0.000000e+00> : vector<8x64xf32>
    %17 = tpu.matmul %5, %16, %cst_19 {dimension_numbers = #tpu.dot_dimension_numbers<[1], [0], [0], [1], [0, 0, 1, 1], [], []>} : vector<8x64xf32>, vector<64x64xf32>, vector<8x64xf32> -> vector<8x64xf32>
    %c0_20 = arith.constant 0 : index
    %c0_21 = arith.constant 0 : index
    %18 = vector.load %arg9[%c0_20, %c0_21] : memref<1x64xf32, #tpu.memory_space<vmem>>, vector<1x64xf32>
    %19 = vector.broadcast %18 : vector<1x64xf32> to vector<8x64xf32>
    %20 = arith.addf %17, %19 : vector<8x64xf32>
    %21 = vector.extract_strided_slice %10 {offsets = [0, 0], sizes = [8, 16], strides = [1, 1]} : vector<8x64xf32> to vector<8x16xf32>
    %22 = vector.extract_strided_slice %15 {offsets = [0, 0], sizes = [8, 16], strides = [1, 1]} : vector<8x64xf32> to vector<8x16xf32>
    %23 = vector.extract_strided_slice %20 {offsets = [0, 0], sizes = [8, 16], strides = [1, 1]} : vector<8x64xf32> to vector<8x16xf32>
    %cst_22 = arith.constant dense<0.000000e+00> : vector<8x8xf32>
    %24 = tpu.matmul %21, %22, %cst_22 {dimension_numbers = #tpu.dot_dimension_numbers<[1], [1], [0], [0], [0, 0, 1, 0], [], []>} : vector<8x16xf32>, vector<8x16xf32>, vector<8x8xf32> -> vector<8x8xf32>
    %cst_23 = arith.constant 2.500000e-01 : f32
    %25 = vector.broadcast %cst_23 : f32 to vector<8x8xf32>
    %26 = arith.mulf %24, %25 : vector<8x8xf32>
    %cst_24 = arith.constant dense<0xFF800000> : vector<8xf32>
    %27 = vector.multi_reduction <maximumf>, %26, %cst_24 [1] : vector<8x8xf32> to vector<8xf32>
    %28 = vector.shape_cast %27 : vector<8xf32> to vector<8x1xf32>
    %29 = vector.broadcast %28 : vector<8x1xf32> to vector<8x8xf32>
    %30 = arith.subf %26, %29 : vector<8x8xf32>
    %31 = math.exp %30 : vector<8x8xf32>
    %cst_25 = arith.constant dense<0.000000e+00> : vector<8xf32>
    %32 = vector.multi_reduction <add>, %31, %cst_25 [1] : vector<8x8xf32> to vector<8xf32>
    %33 = vector.shape_cast %32 : vector<8xf32> to vector<8x1xf32>
    %34 = vector.broadcast %33 : vector<8x1xf32> to vector<8x8xf32>
    %35 = arith.divf %31, %34 : vector<8x8xf32>
    %cst_26 = arith.constant dense<0.000000e+00> : vector<8x16xf32>
    %36 = tpu.matmul %35, %23, %cst_26 {dimension_numbers = #tpu.dot_dimension_numbers<[1], [0], [0], [1], [0, 0, 1, 1], [], []>} : vector<8x8xf32>, vector<8x16xf32>, vector<8x16xf32> -> vector<8x16xf32>
    %37 = vector.extract_strided_slice %10 {offsets = [0, 16], sizes = [8, 16], strides = [1, 1]} : vector<8x64xf32> to vector<8x16xf32>
    %38 = vector.extract_strided_slice %15 {offsets = [0, 16], sizes = [8, 16], strides = [1, 1]} : vector<8x64xf32> to vector<8x16xf32>
    %39 = vector.extract_strided_slice %20 {offsets = [0, 16], sizes = [8, 16], strides = [1, 1]} : vector<8x64xf32> to vector<8x16xf32>
    %cst_27 = arith.constant dense<0.000000e+00> : vector<8x8xf32>
    %40 = tpu.matmul %37, %38, %cst_27 {dimension_numbers = #tpu.dot_dimension_numbers<[1], [1], [0], [0], [0, 0, 1, 0], [], []>} : vector<8x16xf32>, vector<8x16xf32>, vector<8x8xf32> -> vector<8x8xf32>
    %cst_28 = arith.constant 2.500000e-01 : f32
    %41 = vector.broadcast %cst_28 : f32 to vector<8x8xf32>
    %42 = arith.mulf %40, %41 : vector<8x8xf32>
    %cst_29 = arith.constant dense<0xFF800000> : vector<8xf32>
    %43 = vector.multi_reduction <maximumf>, %42, %cst_29 [1] : vector<8x8xf32> to vector<8xf32>
    %44 = vector.shape_cast %43 : vector<8xf32> to vector<8x1xf32>
    %45 = vector.broadcast %44 : vector<8x1xf32> to vector<8x8xf32>
    %46 = arith.subf %42, %45 : vector<8x8xf32>
    %47 = math.exp %46 : vector<8x8xf32>
    %cst_30 = arith.constant dense<0.000000e+00> : vector<8xf32>
    %48 = vector.multi_reduction <add>, %47, %cst_30 [1] : vector<8x8xf32> to vector<8xf32>
    %49 = vector.shape_cast %48 : vector<8xf32> to vector<8x1xf32>
    %50 = vector.broadcast %49 : vector<8x1xf32> to vector<8x8xf32>
    %51 = arith.divf %47, %50 : vector<8x8xf32>
    %cst_31 = arith.constant dense<0.000000e+00> : vector<8x16xf32>
    %52 = tpu.matmul %51, %39, %cst_31 {dimension_numbers = #tpu.dot_dimension_numbers<[1], [0], [0], [1], [0, 0, 1, 1], [], []>} : vector<8x8xf32>, vector<8x16xf32>, vector<8x16xf32> -> vector<8x16xf32>
    %53 = vector.extract_strided_slice %10 {offsets = [0, 32], sizes = [8, 16], strides = [1, 1]} : vector<8x64xf32> to vector<8x16xf32>
    %54 = vector.extract_strided_slice %15 {offsets = [0, 32], sizes = [8, 16], strides = [1, 1]} : vector<8x64xf32> to vector<8x16xf32>
    %55 = vector.extract_strided_slice %20 {offsets = [0, 32], sizes = [8, 16], strides = [1, 1]} : vector<8x64xf32> to vector<8x16xf32>
    %cst_32 = arith.constant dense<0.000000e+00> : vector<8x8xf32>
    %56 = tpu.matmul %53, %54, %cst_32 {dimension_numbers = #tpu.dot_dimension_numbers<[1], [1], [0], [0], [0, 0, 1, 0], [], []>} : vector<8x16xf32>, vector<8x16xf32>, vector<8x8xf32> -> vector<8x8xf32>
    %cst_33 = arith.constant 2.500000e-01 : f32
    %57 = vector.broadcast %cst_33 : f32 to vector<8x8xf32>
    %58 = arith.mulf %56, %57 : vector<8x8xf32>
    %cst_34 = arith.constant dense<0xFF800000> : vector<8xf32>
    %59 = vector.multi_reduction <maximumf>, %58, %cst_34 [1] : vector<8x8xf32> to vector<8xf32>
    %60 = vector.shape_cast %59 : vector<8xf32> to vector<8x1xf32>
    %61 = vector.broadcast %60 : vector<8x1xf32> to vector<8x8xf32>
    %62 = arith.subf %58, %61 : vector<8x8xf32>
    %63 = math.exp %62 : vector<8x8xf32>
    %cst_35 = arith.constant dense<0.000000e+00> : vector<8xf32>
    %64 = vector.multi_reduction <add>, %63, %cst_35 [1] : vector<8x8xf32> to vector<8xf32>
    %65 = vector.shape_cast %64 : vector<8xf32> to vector<8x1xf32>
    %66 = vector.broadcast %65 : vector<8x1xf32> to vector<8x8xf32>
    %67 = arith.divf %63, %66 : vector<8x8xf32>
    %cst_36 = arith.constant dense<0.000000e+00> : vector<8x16xf32>
    %68 = tpu.matmul %67, %55, %cst_36 {dimension_numbers = #tpu.dot_dimension_numbers<[1], [0], [0], [1], [0, 0, 1, 1], [], []>} : vector<8x8xf32>, vector<8x16xf32>, vector<8x16xf32> -> vector<8x16xf32>
    %69 = vector.extract_strided_slice %10 {offsets = [0, 48], sizes = [8, 16], strides = [1, 1]} : vector<8x64xf32> to vector<8x16xf32>
    %70 = vector.extract_strided_slice %15 {offsets = [0, 48], sizes = [8, 16], strides = [1, 1]} : vector<8x64xf32> to vector<8x16xf32>
    %71 = vector.extract_strided_slice %20 {offsets = [0, 48], sizes = [8, 16], strides = [1, 1]} : vector<8x64xf32> to vector<8x16xf32>
    %cst_37 = arith.constant dense<0.000000e+00> : vector<8x8xf32>
    %72 = tpu.matmul %69, %70, %cst_37 {dimension_numbers = #tpu.dot_dimension_numbers<[1], [1], [0], [0], [0, 0, 1, 0], [], []>} : vector<8x16xf32>, vector<8x16xf32>, vector<8x8xf32> -> vector<8x8xf32>
    %cst_38 = arith.constant 2.500000e-01 : f32
    %73 = vector.broadcast %cst_38 : f32 to vector<8x8xf32>
    %74 = arith.mulf %72, %73 : vector<8x8xf32>
    %cst_39 = arith.constant dense<0xFF800000> : vector<8xf32>
    %75 = vector.multi_reduction <maximumf>, %74, %cst_39 [1] : vector<8x8xf32> to vector<8xf32>
    %76 = vector.shape_cast %75 : vector<8xf32> to vector<8x1xf32>
    %77 = vector.broadcast %76 : vector<8x1xf32> to vector<8x8xf32>
    %78 = arith.subf %74, %77 : vector<8x8xf32>
    %79 = math.exp %78 : vector<8x8xf32>
    %cst_40 = arith.constant dense<0.000000e+00> : vector<8xf32>
    %80 = vector.multi_reduction <add>, %79, %cst_40 [1] : vector<8x8xf32> to vector<8xf32>
    %81 = vector.shape_cast %80 : vector<8xf32> to vector<8x1xf32>
    %82 = vector.broadcast %81 : vector<8x1xf32> to vector<8x8xf32>
    %83 = arith.divf %79, %82 : vector<8x8xf32>
    %cst_41 = arith.constant dense<0.000000e+00> : vector<8x16xf32>
    %84 = tpu.matmul %83, %71, %cst_41 {dimension_numbers = #tpu.dot_dimension_numbers<[1], [0], [0], [1], [0, 0, 1, 1], [], []>} : vector<8x8xf32>, vector<8x16xf32>, vector<8x16xf32> -> vector<8x16xf32>
    %85 = tpu.concatenate %36, %52, %68, %84 in 1 : vector<8x16xf32>, vector<8x16xf32>, vector<8x16xf32>, vector<8x16xf32> -> vector<8x64xf32>
    %c0_42 = arith.constant 0 : index
    %c0_43 = arith.constant 0 : index
    %86 = vector.load %arg10[%c0_42, %c0_43] : memref<64x64xf32, #tpu.memory_space<vmem>>, vector<64x64xf32>
    %cst_44 = arith.constant dense<0.000000e+00> : vector<8x64xf32>
    %87 = tpu.matmul %85, %86, %cst_44 {dimension_numbers = #tpu.dot_dimension_numbers<[1], [0], [0], [1], [0, 0, 1, 1], [], []>} : vector<8x64xf32>, vector<64x64xf32>, vector<8x64xf32> -> vector<8x64xf32>
    %c0_45 = arith.constant 0 : index
    %c0_46 = arith.constant 0 : index
    %88 = vector.load %arg11[%c0_45, %c0_46] : memref<1x64xf32, #tpu.memory_space<vmem>>, vector<1x64xf32>
    %89 = vector.broadcast %88 : vector<1x64xf32> to vector<8x64xf32>
    %90 = arith.addf %87, %89 : vector<8x64xf32>
    %c0_47 = arith.constant 0 : index
    %c0_48 = arith.constant 0 : index
    %c0_49 = arith.constant 0 : index
    %91 = vector.load %arg12[%c0_47, %c0_48, %c0_49] : memref<1x8x64xf32, #tpu.memory_space<vmem>>, vector<1x8x64xf32>
    %92 = vector.shape_cast %91 : vector<1x8x64xf32> to vector<8x64xf32>
    %93 = vector.shape_cast %90 : vector<8x64xf32> to vector<1x8x64xf32>
    tpu.vector_store %arg12[%c0_47, %c0_48, %c0_49], %93 {strides = array<i32>} : memref<1x8x64xf32, #tpu.memory_space<vmem>>, vector<1x8x64xf32>,
    return
  }
  func.func @transform_0(%arg0: i32) -> (i32, i32, i32) {
    %c0_i32 = arith.constant 0 : i32
    %c0_i32_0 = arith.constant 0 : i32
    %c0_i32_1 = arith.constant 0 : i32
    return %arg0, %c0_i32, %c0_i32_0 : i32, i32, i32
  }
  func.func @transform_1(%arg0: i32) -> (i32, i32, i32) {
    %c0_i32 = arith.constant 0 : i32
    %c0_i32_0 = arith.constant 0 : i32
    %c0_i32_1 = arith.constant 0 : i32
    return %arg0, %c0_i32, %c0_i32_0 : i32, i32, i32
  }
  func.func @transform_2(%arg0: i32) -> (i32, i32, i32) {
    %c0_i32 = arith.constant 0 : i32
    %c0_i32_0 = arith.constant 0 : i32
    %c0_i32_1 = arith.constant 0 : i32
    return %arg0, %c0_i32, %c0_i32_0 : i32, i32, i32
  }
  func.func @transform_3(%arg0: i32) -> (i32, i32) {
    %c0_i32 = arith.constant 0 : i32
    %c0_i32_0 = arith.constant 0 : i32
    %c0_i32_1 = arith.constant 0 : i32
    return %c0_i32, %c0_i32_0 : i32, i32
  }
  func.func @transform_4(%arg0: i32) -> (i32, i32) {
    %c0_i32 = arith.constant 0 : i32
    %c0_i32_0 = arith.constant 0 : i32
    %c0_i32_1 = arith.constant 0 : i32
    return %c0_i32, %c0_i32_0 : i32, i32
  }
  func.func @transform_5(%arg0: i32) -> (i32, i32) {
    %c0_i32 = arith.constant 0 : i32
    %c0_i32_0 = arith.constant 0 : i32
    %c0_i32_1 = arith.constant 0 : i32
    return %c0_i32, %c0_i32_0 : i32, i32
  }
  func.func @transform_6(%arg0: i32) -> (i32, i32) {
    %c0_i32 = arith.constant 0 : i32
    %c0_i32_0 = arith.constant 0 : i32
    %c0_i32_1 = arith.constant 0 : i32
    return %c0_i32, %c0_i32_0 : i32, i32
  }
  func.func @transform_7(%arg0: i32) -> (i32, i32) {
    %c0_i32 = arith.constant 0 : i32
    %c0_i32_0 = arith.constant 0 : i32
    %c0_i32_1 = arith.constant 0 : i32
    return %c0_i32, %c0_i32_0 : i32, i32
  }
  func.func @transform_8(%arg0: i32) -> (i32, i32) {
    %c0_i32 = arith.constant 0 : i32
    %c0_i32_0 = arith.constant 0 : i32
    %c0_i32_1 = arith.constant 0 : i32
    return %c0_i32, %c0_i32_0 : i32, i32
  }
  func.func @transform_9(%arg0: i32) -> (i32, i32) {
    %c0_i32 = arith.constant 0 : i32
    %c0_i32_0 = arith.constant 0 : i32
    %c0_i32_1 = arith.constant 0 : i32
    return %c0_i32, %c0_i32_0 : i32, i32
  }
  func.func @transform_10(%arg0: i32) -> (i32, i32) {
    %c0_i32 = arith.constant 0 : i32
    %c0_i32_0 = arith.constant 0 : i32
    %c0_i32_1 = arith.constant 0 : i32
    return %c0_i32, %c0_i32_0 : i32, i32
  }
  func.func @transform_11(%arg0: i32) -> (i32, i32, i32) {
    %c0_i32 = arith.constant 0 : i32
    %c0_i32_0 = arith.constant 0 : i32
    %c0_i32_1 = arith.constant 0 : i32
    return %arg0, %c0_i32, %c0_i32_0 : i32, i32, i32
  }
}

</mosaic_0001>

<llo_original>
// kernel: tpu_custom_call.1
$region0: #{tpu_custom_call.1}
  #allocation0 [shape = 'u32[]', space=smem, size = 0x4, offset = 0x4, fixed_abs, tag = 'smem constant byte address 0x4 - core index']
  #allocation1 [shape = 'u32[144,128]{1,0:T(1,128)}', space=vmem, size = 0x12000, scoped, tag = 'internal scratch']
  %s0 = inlined_call_operand.hbm [shape: f32[2,8,64], index: 0, kind: input, shape index: {}]
  %s1 = inlined_call_operand.hbm [shape: f32[2,8,64], index: 1, kind: input, shape index: {}]
  %s2 = inlined_call_operand.hbm [shape: f32[2,8,64], index: 2, kind: input, shape index: {}]
  %s3 = inlined_call_operand.hbm [shape: f32[64,64], index: 3, kind: input, shape index: {}]
  %s4 = inlined_call_operand.vmem [shape: f32[1,64], index: 4, kind: input, shape index: {}]
  %s5 = inlined_call_operand.hbm [shape: f32[64,64], index: 5, kind: input, shape index: {}]
  %s6 = inlined_call_operand.vmem [shape: f32[1,64], index: 6, kind: input, shape index: {}]
  %s7 = inlined_call_operand.hbm [shape: f32[64,64], index: 7, kind: input, shape index: {}]
  %s8 = inlined_call_operand.vmem [shape: f32[1,64], index: 8, kind: input, shape index: {}]
  %s9 = inlined_call_operand.hbm [shape: f32[64,64], index: 9, kind: input, shape index: {}]
  %s10 = inlined_call_operand.vmem [shape: f32[1,64], index: 10, kind: input, shape index: {}]
  %s11 = inlined_call_operand.hbm [shape: f32[2,8,64], index: 11, kind: output, shape index: {}]
  %s12 = sld [smem:[#allocation0]]
  $region105: #{tpu_custom_call.1} parent=0
    _
  %s14 = ssub.s32 1, %s12
  %s15 = scalar_select 0, %s14, %s12
  $region1: #{tpu_custom_call.1} parent=0
    #allocation2 [shape = 'u8[8192]{0}', space=vmem, size = 0x2000, scoped, tag = 'input window, operand 0']
    #allocation3 [shape = 's32[2]{0}', space=sflag, size = 0x8, scoped, tag = 'scoped memory for tpu_custom_call.1']
    #allocation4 [shape = 's32[2]{0}', space=sflag, size = 0x8, scoped, tag = 'scoped memory for tpu_custom_call.1']
    #allocation5 [shape = 'u8[8192]{0}', space=vmem, size = 0x2000, scoped, tag = 'input window, operand 1']
    #allocation6 [shape = 's32[2]{0}', space=sflag, size = 0x8, scoped, tag = 'scoped memory for tpu_custom_call.1']
    #allocation7 [shape = 'u8[8192]{0}', space=vmem, size = 0x2000, scoped, tag = 'input window, operand 2']
    #allocation8 [shape = 'u8[32768]{0}', space=vmem, size = 0x8000, scoped, tag = 'input window, operand 3, single buffered']
    #allocation9 [shape = 's32[1]{0}', space=sflag, size = 0x4, scoped, tag = 'scoped memory for tpu_custom_call.1']
    #allocation10 [shape = 'u8[32768]{0}', space=vmem, size = 0x8000, scoped, tag = 'input window, operand 5, single buffered']
    #allocation11 [shape = 'u8[32768]{0}', space=vmem, size = 0x8000, scoped, tag = 'input window, operand 7, single buffered']
    #allocation12 [shape = 's32[1]{0}', space=sflag, size = 0x4, scoped, tag = 'scoped memory for tpu_custom_call.1']
    #allocation13 [shape = 'u8[32768]{0}', space=vmem, size = 0x8000, scoped, tag = 'input window, operand 9, single buffered']
    #allocation14 [shape = 'u8[8192]{0}', space=vmem, size = 0x2000, scoped, tag = 'output window, operand 0']
    %16 = vsyncpa [#allocation3], 0
    %s17 = scalar_lea.sflag [#allocation3], 1
    %18 = vsyncpa %s17, 0
    %19 = vsyncpa [#allocation6], 0
    %s20 = scalar_lea.sflag [#allocation6], 1
    %21 = vsyncpa %s20, 0
    %22 = vsyncpa [#allocation9], 0
    %23 = vsyncpa [#allocation12], 0
    %24 = vsyncpa [#allocation4], 0
    %s25 = scalar_lea.sflag [#allocation4], 1
    %26 = vsyncpa %s25, 0
    loop: start=0, step=1, limit=4
    $region2: #{tpu_custom_call.1} parent=1 // loop_pre_header
      _
    $region3: #{tpu_custom_call.1} parent=1 // loop_header
      %s28 = sphi 0, %s32
      %p29 = scmp.ge.s32.totalorder %s28, 4
      %s38 = sphi 0, %s40
      %s41 = sphi 0, %s38
      %s42 = sphi 0, %s41
      %s58 = sphi 0, %s42
      %s64 = sphi 0, %s66
      %s67 = sphi 0, %s64
      %s68 = sphi 0, %s67
      %s84 = sphi 0, %s68
      %s90 = sphi 0, %s92
      %s93 = sphi 0, %s90
      %s94 = sphi 0, %s93
      %s110 = sphi 0, %s94
      %s114 = sphi 0, %s114
      %s116 = sphi 0, %s114
      %s117 = sphi 0, %s116
      %s131 = sphi 0, %s117
      %s135 = sphi 0, %s135
      %s137 = sphi 0, %s135
      %s138 = sphi 0, %s137
      %s152 = sphi 0, %s138
      %s156 = sphi 0, %s156
      %s158 = sphi 0, %s156
      %s159 = sphi 0, %s158
      %s173 = sphi 0, %s159
      %s177 = sphi 0, %s177
      %s179 = sphi 0, %s177
      %s180 = sphi 0, %s179
      %s194 = sphi 0, %s180
      %s198 = sphi 0, %s198
      %s200 = sphi 0, %s198
      %s201 = sphi 0, %s200
      %s215 = sphi 0, %s201
      %s219 = sphi 0, %s219
      %s221 = sphi 0, %s219
      %s222 = sphi 0, %s221
      %s236 = sphi 0, %s222
      %s240 = sphi 0, %s240
      %s242 = sphi 0, %s240
      %s243 = sphi 0, %s242
      %s257 = sphi 0, %s243
      %s261 = sphi 0, %s261
      %s263 = sphi 0, %s261
      %s264 = sphi 0, %s263
      %s278 = sphi 0, %s264
      %s284 = sphi 0, %s286
      %s287 = sphi 0, %s284
      %s288 = sphi 0, %s287
      %s304 = sphi 0, %s288
    $region4: #{tpu_custom_call.1} parent=1 // loop_header_branch
      %31 = sbr.rel (%p29) target = $region8
    $region5: #{tpu_custom_call.1} parent=1 // loop_body
      %s33 = ssub.s32 %s28, 1
      %s34 = ssub.s32 %s28, 2
      %s35 = sadd.s32 %s28, 1
      %s36 = ssub.s32 %s28, %s35
      %p37 = scmp.eq.s32.totalorder %s36, 0
      %s39 = sadd.s32 %s38, 1
      %s40 = scalar_select %p37, %s38, %s39
      %p43 = pneg %p37
      %p44 = scmp.eq.s32.totalorder %s28, 1
      %p45 = por %p43, %p44
      %p46 = scmp.ne.s32.totalorder %s38, %s41
      %p47 = scmp.eq.s32.totalorder %s28, 0
      %p48 = por %p46, %p47
      %p49 = scmp.ne.s32.totalorder %s38, %s41
      %p50 = scmp.eq.s32.totalorder %s33, 1
      %p51 = por %p49, %p50
      %p52 = scmp.ne.s32.totalorder %s41, %s42
      %p53 = scmp.eq.s32.totalorder %s33, 0
      %p54 = por %p52, %p53
      %p55 = scmp.ne.s32.totalorder %s41, %s42
      %p56 = scmp.eq.s32.totalorder %s34, 1
      %p57 = por %p55, %p56
      %p59 = scmp.ne.s32.totalorder %s42, %s58
      %p60 = scmp.eq.s32.totalorder %s34, 0
      %p61 = por %p59, %p60
      %s62 = ssub.s32 %s28, %s35
      %p63 = scmp.eq.s32.totalorder %s62, 0
      %s65 = sadd.s32 %s64, 1
      %s66 = scalar_select %p63, %s64, %s65
      %p69 = pneg %p63
      %p70 = scmp.eq.s32.totalorder %s28, 1
      %p71 = por %p69, %p70
      %p72 = scmp.ne.s32.totalorder %s64, %s67
      %p73 = scmp.eq.s32.totalorder %s28, 0
      %p74 = por %p72, %p73
      %p75 = scmp.ne.s32.totalorder %s64, %s67
      %p76 = scmp.eq.s32.totalorder %s33, 1
      %p77 = por %p75, %p76
      %p78 = scmp.ne.s32.totalorder %s67, %s68
      %p79 = scmp.eq.s32.totalorder %s33, 0
      %p80 = por %p78, %p79
      %p81 = scmp.ne.s32.totalorder %s67, %s68
      %p82 = scmp.eq.s32.totalorder %s34, 1
      %p83 = por %p81, %p82
      %p85 = scmp.ne.s32.totalorder %s68, %s84
      %p86 = scmp.eq.s32.totalorder %s34, 0
      %p87 = por %p85, %p86
      %s88 = ssub.s32 %s28, %s35
      %p89 = scmp.eq.s32.totalorder %s88, 0
      %s91 = sadd.s32 %s90, 1
      %s92 = scalar_select %p89, %s90, %s91
      %p95 = pneg %p89
      %p96 = scmp.eq.s32.totalorder %s28, 1
      %p97 = por %p95, %p96
      %p98 = scmp.ne.s32.totalorder %s90, %s93
      %p99 = scmp.eq.s32.totalorder %s28, 0
      %p100 = por %p98, %p99
      %p101 = scmp.ne.s32.totalorder %s90, %s93
      %p102 = scmp.eq.s32.totalorder %s33, 1
      %p103 = por %p101, %p102
      %p104 = scmp.ne.s32.totalorder %s93, %s94
      %p105 = scmp.eq.s32.totalorder %s33, 0
      %p106 = por %p104, %p105
      %p107 = scmp.ne.s32.totalorder %s93, %s94
      %p108 = scmp.eq.s32.totalorder %s34, 1
      %p109 = por %p107, %p108
      %p111 = scmp.ne.s32.totalorder %s94, %s110
      %p112 = scmp.eq.s32.totalorder %s34, 0
      %p113 = por %p111, %p112
      %s115 = sadd.s32 %s114, 1
      %p118 = scmp.eq.s32.totalorder %s28, 1
      %p119 = scmp.ne.s32.totalorder %s114, %s116
      %p120 = scmp.eq.s32.totalorder %s28, 0
      %p121 = por %p119, %p120
      %p122 = scmp.ne.s32.totalorder %s114, %s116
      %p123 = scmp.eq.s32.totalorder %s33, 1
      %p124 = por %p122, %p123
      %p125 = scmp.ne.s32.totalorder %s116, %s117
      %p126 = scmp.eq.s32.totalorder %s33, 0
      %p127 = por %p125, %p126
      %p128 = scmp.ne.s32.totalorder %s116, %s117
      %p129 = scmp.eq.s32.totalorder %s34, 1
      %p130 = por %p128, %p129
      %p132 = scmp.ne.s32.totalorder %s117, %s131
      %p133 = scmp.eq.s32.totalorder %s34, 0
      %p134 = por %p132, %p133
      %s136 = sadd.s32 %s135, 1
      %p139 = scmp.eq.s32.totalorder %s28, 1
      %p140 = scmp.ne.s32.totalorder %s135, %s137
      %p141 = scmp.eq.s32.totalorder %s28, 0
      %p142 = por %p140, %p141
      %p143 = scmp.ne.s32.totalorder %s135, %s137
      %p144 = scmp.eq.s32.totalorder %s33, 1
      %p145 = por %p143, %p144
      %p146 = scmp.ne.s32.totalorder %s137, %s138
      %p147 = scmp.eq.s32.totalorder %s33, 0
      %p148 = por %p146, %p147
      %p149 = scmp.ne.s32.totalorder %s137, %s138
      %p150 = scmp.eq.s32.totalorder %s34, 1
      %p151 = por %p149, %p150
      %p153 = scmp.ne.s32.totalorder %s138, %s152
      %p154 = scmp.eq.s32.totalorder %s34, 0
      %p155 = por %p153, %p154
      %s157 = sadd.s32 %s156, 1
      %p160 = scmp.eq.s32.totalorder %s28, 1
      %p161 = scmp.ne.s32.totalorder %s156, %s158
      %p162 = scmp.eq.s32.totalorder %s28, 0
      %p163 = por %p161, %p162
      %p164 = scmp.ne.s32.totalorder %s156, %s158
      %p165 = scmp.eq.s32.totalorder %s33, 1
      %p166 = por %p164, %p165
      %p167 = scmp.ne.s32.totalorder %s158, %s159
      %p168 = scmp.eq.s32.totalorder %s33, 0
      %p169 = por %p167, %p168
      %p170 = scmp.ne.s32.totalorder %s158, %s159
      %p171 = scmp.eq.s32.totalorder %s34, 1
      %p172 = por %p170, %p171
      %p174 = scmp.ne.s32.totalorder %s159, %s173
      %p175 = scmp.eq.s32.totalorder %s34, 0
      %p176 = por %p174, %p175
      %s178 = sadd.s32 %s177, 1
      %p181 = scmp.eq.s32.totalorder %s28, 1
      %p182 = scmp.ne.s32.totalorder %s177, %s179
      %p183 = scmp.eq.s32.totalorder %s28, 0
      %p184 = por %p182, %p183
      %p185 = scmp.ne.s32.totalorder %s177, %s179
      %p186 = scmp.eq.s32.totalorder %s33, 1
      %p187 = por %p185, %p186
      %p188 = scmp.ne.s32.totalorder %s179, %s180
      %p189 = scmp.eq.s32.totalorder %s33, 0
      %p190 = por %p188, %p189
      %p191 = scmp.ne.s32.totalorder %s179, %s180
      %p192 = scmp.eq.s32.totalorder %s34, 1
      %p193 = por %p191, %p192
      %p195 = scmp.ne.s32.totalorder %s180, %s194
      %p196 = scmp.eq.s32.totalorder %s34, 0
      %p197 = por %p195, %p196
      %s199 = sadd.s32 %s198, 1
      %p202 = scmp.eq.s32.totalorder %s28, 1
      %p203 = scmp.ne.s32.totalorder %s198, %s200
      %p204 = scmp.eq.s32.totalorder %s28, 0
      %p205 = por %p203, %p204
      %p206 = scmp.ne.s32.totalorder %s198, %s200
      %p207 = scmp.eq.s32.totalorder %s33, 1
      %p208 = por %p206, %p207
      %p209 = scmp.ne.s32.totalorder %s200, %s201
      %p210 = scmp.eq.s32.totalorder %s33, 0
      %p211 = por %p209, %p210
      %p212 = scmp.ne.s32.totalorder %s200, %s201
      %p213 = scmp.eq.s32.totalorder %s34, 1
      %p214 = por %p212, %p213
      %p216 = scmp.ne.s32.totalorder %s201, %s215
      %p217 = scmp.eq.s32.totalorder %s34, 0
      %p218 = por %p216, %p217
      %s220 = sadd.s32 %s219, 1
      %p223 = scmp.eq.s32.totalorder %s28, 1
      %p224 = scmp.ne.s32.totalorder %s219, %s221
      %p225 = scmp.eq.s32.totalorder %s28, 0
      %p226 = por %p224, %p225
      %p227 = scmp.ne.s32.totalorder %s219, %s221
      %p228 = scmp.eq.s32.totalorder %s33, 1
      %p229 = por %p227, %p228
      %p230 = scmp.ne.s32.totalorder %s221, %s222
      %p231 = scmp.eq.s32.totalorder %s33, 0
      %p232 = por %p230, %p231
      %p233 = scmp.ne.s32.totalorder %s221, %s222
      %p234 = scmp.eq.s32.totalorder %s34, 1
      %p235 = por %p233, %p234
      %p237 = scmp.ne.s32.totalorder %s222, %s236
      %p238 = scmp.eq.s32.totalorder %s34, 0
      %p239 = por %p237, %p238
      %s241 = sadd.s32 %s240, 1
      %p244 = scmp.eq.s32.totalorder %s28, 1
      %p245 = scmp.ne.s32.totalorder %s240, %s242
      %p246 = scmp.eq.s32.totalorder %s28, 0
      %p247 = por %p245, %p246
      %p248 = scmp.ne.s32.totalorder %s240, %s242
      %p249 = scmp.eq.s32.totalorder %s33, 1
      %p250 = por %p248, %p249
      %p251 = scmp.ne.s32.totalorder %s242, %s243
      %p252 = scmp.eq.s32.totalorder %s33, 0
      %p253 = por %p251, %p252
      %p254 = scmp.ne.s32.totalorder %s242, %s243
      %p255 = scmp.eq.s32.totalorder %s34, 1
      %p256 = por %p254, %p255
      %p258 = scmp.ne.s32.totalorder %s243, %s257
      %p259 = scmp.eq.s32.totalorder %s34, 0
      %p260 = por %p258, %p259
      %s262 = sadd.s32 %s261, 1
      %p265 = scmp.eq.s32.totalorder %s28, 1
      %p266 = scmp.ne.s32.totalorder %s261, %s263
      %p267 = scmp.eq.s32.totalorder %s28, 0
      %p268 = por %p266, %p267
      %p269 = scmp.ne.s32.totalorder %s261, %s263
      %p270 = scmp.eq.s32.totalorder %s33, 1
      %p271 = por %p269, %p270
      %p272 = scmp.ne.s32.totalorder %s263, %s264
      %p273 = scmp.eq.s32.totalorder %s33, 0
      %p274 = por %p272, %p273
      %p275 = scmp.ne.s32.totalorder %s263, %s264
      %p276 = scmp.eq.s32.totalorder %s34, 1
      %p277 = por %p275, %p276
      %p279 = scmp.ne.s32.totalorder %s264, %s278
      %p280 = scmp.eq.s32.totalorder %s34, 0
      %p281 = por %p279, %p280
      %s282 = ssub.s32 %s28, %s35
      %p283 = scmp.eq.s32.totalorder %s282, 0
      %s285 = sadd.s32 %s284, 1
      %s286 = scalar_select %p283, %s284, %s285
      %p289 = pneg %p283
      %p290 = scmp.eq.s32.totalorder %s28, 1
      %p291 = por %p289, %p290
      %p292 = scmp.ne.s32.totalorder %s284, %s287
      %p293 = scmp.eq.s32.totalorder %s28, 0
      %p294 = por %p292, %p293
      %p295 = scmp.ne.s32.totalorder %s284, %s287
      %p296 = scmp.eq.s32.totalorder %s33, 1
      %p297 = por %p295, %p296
      %p298 = scmp.ne.s32.totalorder %s287, %s288
      %p299 = scmp.eq.s32.totalorder %s33, 0
      %p300 = por %p298, %p299
      %p301 = scmp.ne.s32.totalorder %s287, %s288
      %p302 = scmp.eq.s32.totalorder %s34, 1
      %p303 = por %p301, %p302
      %p305 = scmp.ne.s32.totalorder %s288, %s304
      %p306 = scmp.eq.s32.totalorder %s34, 0
      %p307 = por %p305, %p306
      %p308 = scmp.le.s32.totalorder 1, %s28
      %p309 = scmp.lt.s32.totalorder %s28, 3
      %p310 = pnand %p308, %p309
      %p311 = pneg %p310
      // Predicated region
      $region9: #{tpu_custom_call.1} parent=5 // pred_check
        _
      $region10: #{tpu_custom_call.1} parent=5 // pred_check_branch
        %313 = sbr.rel (%p310) target = $region12
      $region11: #{tpu_custom_call.1} parent=5 // pred_region
        %s314 = ssub.s32 %s28, 1
        // Predicated region
        $region13: #{tpu_custom_call.1} parent=11 // pred_check
          %p315 = pneg %p127
        $region14: #{tpu_custom_call.1} parent=11 // pred_check_branch
          %317 = sbr.rel (%p315) target = $region16
        $region15: #{tpu_custom_call.1} parent=11 // pred_region
          %s319 = ssub.s32 1024, 1024
          %320 = vsyncadd [#allocation9], %s319
          %s321 = sshll.u32 [#allocation8], 4
          %s322 = int_to_ptr.vmem [resolvable:$true] %s321
          %327 = dma.hbm_to_vmem [thread:$0]  %s3, 1024, %s322, [#allocation9], 128, 128, 8
        $region16: #{tpu_custom_call.1} parent=11 // pred_fallthru
          _
        // Predicated region
        $region17: #{tpu_custom_call.1} parent=11 // pred_check
          %p328 = pneg %p148
        $region18: #{tpu_custom_call.1} parent=11 // pred_check_branch
          %330 = sbr.rel (%p328) target = $region20
        $region19: #{tpu_custom_call.1} parent=11 // pred_region
          _
        $region20: #{tpu_custom_call.1} parent=11 // pred_fallthru
          _
        // Predicated region
        $region21: #{tpu_custom_call.1} parent=11 // pred_check
          %p331 = pneg %p169
        $region22: #{tpu_custom_call.1} parent=11 // pred_check_branch
          %333 = sbr.rel (%p331) target = $region24
        $region23: #{tpu_custom_call.1} parent=11 // pred_region
          %s335 = ssub.s32 1024, 1024
          %336 = vsyncadd [#allocation9], %s335
          %s337 = sshll.u32 [#allocation10], 4
          %s338 = int_to_ptr.vmem [resolvable:$true] %s337
          %343 = dma.hbm_to_vmem [thread:$0]  %s5, 1024, %s338, [#allocation9], 128, 128, 8
        $region24: #{tpu_custom_call.1} parent=11 // pred_fallthru
          _
        // Predicated region
        $region25: #{tpu_custom_call.1} parent=11 // pred_check
          %p344 = pneg %p190
        $region26: #{tpu_custom_call.1} parent=11 // pred_check_branch
          %346 = sbr.rel (%p344) target = $region28
        $region27: #{tpu_custom_call.1} parent=11 // pred_region
          _
        $region28: #{tpu_custom_call.1} parent=11 // pred_fallthru
          _
        // Predicated region
        $region29: #{tpu_custom_call.1} parent=11 // pred_check
          %p347 = pneg %p211
        $region30: #{tpu_custom_call.1} parent=11 // pred_check_branch
          %349 = sbr.rel (%p347) target = $region32
        $region31: #{tpu_custom_call.1} parent=11 // pred_region
          %s351 = ssub.s32 1024, 1024
          %352 = vsyncadd [#allocation12], %s351
          %s353 = sshll.u32 [#allocation11], 4
          %s354 = int_to_ptr.vmem [resolvable:$true] %s353
          %359 = dma.hbm_to_vmem [thread:$0]  %s7, 1024, %s354, [#allocation12], 128, 128, 8
        $region32: #{tpu_custom_call.1} parent=11 // pred_fallthru
          _
        // Predicated region
        $region33: #{tpu_custom_call.1} parent=11 // pred_check
          %p360 = pneg %p232
        $region34: #{tpu_custom_call.1} parent=11 // pred_check_branch
          %362 = sbr.rel (%p360) target = $region36
        $region35: #{tpu_custom_call.1} parent=11 // pred_region
          _
        $region36: #{tpu_custom_call.1} parent=11 // pred_fallthru
          _
        // Predicated region
        $region37: #{tpu_custom_call.1} parent=11 // pred_check
          %p363 = pneg %p253
        $region38: #{tpu_custom_call.1} parent=11 // pred_check_branch
          %365 = sbr.rel (%p363) target = $region40
        $region39: #{tpu_custom_call.1} parent=11 // pred_region
          %s367 = ssub.s32 1024, 1024
          %368 = vsyncadd [#allocation12], %s367
          %s369 = sshll.u32 [#allocation13], 4
          %s370 = int_to_ptr.vmem [resolvable:$true] %s369
          %375 = dma.hbm_to_vmem [thread:$0]  %s9, 1024, %s370, [#allocation12], 128, 128, 8
        $region40: #{tpu_custom_call.1} parent=11 // pred_fallthru
          _
        // Predicated region
        $region41: #{tpu_custom_call.1} parent=11 // pred_check
          %p376 = pneg %p274
        $region42: #{tpu_custom_call.1} parent=11 // pred_check_branch
          %378 = sbr.rel (%p376) target = $region44
        $region43: #{tpu_custom_call.1} parent=11 // pred_region
          _
        $region44: #{tpu_custom_call.1} parent=11 // pred_fallthru
          _
      $region12: #{tpu_custom_call.1} parent=5 // pred_fallthru
        _
      %p379 = scmp.lt.s32.totalorder %s28, 2
      // Predicated region
      $region45: #{tpu_custom_call.1} parent=5 // pred_check
        %p380 = pneg %p379
      $region46: #{tpu_custom_call.1} parent=5 // pred_check_branch
        %382 = sbr.rel (%p380) target = $region48
      $region47: #{tpu_custom_call.1} parent=5 // pred_region
        // Predicated region
        $region49: #{tpu_custom_call.1} parent=47 // pred_check
          %p383 = pneg %p48
        $region50: #{tpu_custom_call.1} parent=47 // pred_check_branch
          %385 = sbr.rel (%p383) target = $region52
        $region51: #{tpu_custom_call.1} parent=47 // pred_region
          %s386 = sand.u32 %s38, 1
          %s387 = scalar_lea.sflag [#allocation3], %s386
          %s388 = sand.u32 %s38, 1
          %s389 = smul.addr %s388, 8
          %s390 = scalar_lea.vmem [#allocation2], %s389
          %s392 = ssub.s32 128, 128
          %393 = vsyncadd %s387, %s392
          %s394 = smul.addr %s28, 128
          %s395 = scalar_lea.hbm %s0, %s394
          %s397 = sshll.u32 %s390, 4
          %s398 = int_to_ptr.vmem [resolvable:$true] %s397
          %400 = dma.hbm_to_vmem [thread:$0]  %s395, 128, %s398, %s387
        $region52: #{tpu_custom_call.1} parent=47 // pred_fallthru
          _
        // Predicated region
        $region53: #{tpu_custom_call.1} parent=47 // pred_check
          %p401 = pneg %p74
        $region54: #{tpu_custom_call.1} parent=47 // pred_check_branch
          %403 = sbr.rel (%p401) target = $region56
        $region55: #{tpu_custom_call.1} parent=47 // pred_region
          %s404 = sand.u32 %s28, 1
          %s405 = scalar_lea.sflag [#allocation6], %s404
          %s406 = sand.u32 %s64, 1
          %s407 = smul.addr %s406, 8
          %s408 = scalar_lea.vmem [#allocation5], %s407
          %s410 = ssub.s32 128, 128
          %411 = vsyncadd %s405, %s410
          %s412 = smul.addr %s28, 128
          %s413 = scalar_lea.hbm %s1, %s412
          %s415 = sshll.u32 %s408, 4
          %s416 = int_to_ptr.vmem [resolvable:$true] %s415
          %418 = dma.hbm_to_vmem [thread:$0]  %s413, 128, %s416, %s405
        $region56: #{tpu_custom_call.1} parent=47 // pred_fallthru
          _
        // Predicated region
        $region57: #{tpu_custom_call.1} parent=47 // pred_check
          %p419 = pneg %p100
        $region58: #{tpu_custom_call.1} parent=47 // pred_check_branch
          %421 = sbr.rel (%p419) target = $region60
        $region59: #{tpu_custom_call.1} parent=47 // pred_region
          %s422 = sand.u32 %s28, 1
          %s423 = scalar_lea.sflag [#allocation6], %s422
          %s424 = sand.u32 %s90, 1
          %s425 = smul.addr %s424, 8
          %s426 = scalar_lea.vmem [#allocation7], %s425
          %s428 = ssub.s32 128, 128
          %429 = vsyncadd %s423, %s428
          %s430 = smul.addr %s28, 128
          %s431 = scalar_lea.hbm %s2, %s430
          %s433 = sshll.u32 %s426, 4
          %s434 = int_to_ptr.vmem [resolvable:$true] %s433
          %436 = dma.hbm_to_vmem [thread:$0]  %s431, 128, %s434, %s423
        $region60: #{tpu_custom_call.1} parent=47 // pred_fallthru
          _
      $region48: #{tpu_custom_call.1} parent=5 // pred_fallthru
        _
      %p437 = scmp.le.s32.totalorder 1, %s28
      %p438 = scmp.lt.s32.totalorder %s28, 3
      %p439 = pnand %p437, %p438
      %p440 = pneg %p439
      // Predicated region
      $region61: #{tpu_custom_call.1} parent=5 // pred_check
        _
      $region62: #{tpu_custom_call.1} parent=5 // pred_check_branch
        %442 = sbr.rel (%p439) target = $region64
      $region63: #{tpu_custom_call.1} parent=5 // pred_region
        %s443 = ssub.s32 %s28, 1
        %s444 = sand.u32 %s41, 1
        %s445 = scalar_lea.sflag [#allocation3], %s444
        %s446 = sand.u32 %s41, 1
        %s447 = smul.addr %s446, 8
        %s448 = scalar_lea.vmem [#allocation2], %s447
        // Predicated region
        $region65: #{tpu_custom_call.1} parent=63 // pred_check
          %p449 = pneg %p54
        $region66: #{tpu_custom_call.1} parent=63 // pred_check_branch
          %451 = sbr.rel (%p449) target = $region68
        $region67: #{tpu_custom_call.1} parent=63 // pred_region
          %452 = dma.done %s445, 128
        $region68: #{tpu_custom_call.1} parent=63 // pred_fallthru
          _
        %s453 = sand.u32 %s33, 1
        %s454 = scalar_lea.sflag [#allocation6], %s453
        %s455 = sand.u32 %s67, 1
        %s456 = smul.addr %s455, 8
        %s457 = scalar_lea.vmem [#allocation5], %s456
        // Predicated region
        $region69: #{tpu_custom_call.1} parent=63 // pred_check
          %p458 = pneg %p80
        $region70: #{tpu_custom_call.1} parent=63 // pred_check_branch
          %460 = sbr.rel (%p458) target = $region72
        $region71: #{tpu_custom_call.1} parent=63 // pred_region
          %461 = dma.done %s454, 128
        $region72: #{tpu_custom_call.1} parent=63 // pred_fallthru
          _
        %s462 = sand.u32 %s33, 1
        %s463 = scalar_lea.sflag [#allocation6], %s462
        %s464 = sand.u32 %s93, 1
        %s465 = smul.addr %s464, 8
        %s466 = scalar_lea.vmem [#allocation7], %s465
        // Predicated region
        $region73: #{tpu_custom_call.1} parent=63 // pred_check
          %p467 = pneg %p106
        $region74: #{tpu_custom_call.1} parent=63 // pred_check_branch
          %469 = sbr.rel (%p467) target = $region76
        $region75: #{tpu_custom_call.1} parent=63 // pred_region
          %470 = dma.done %s463, 128
        $region76: #{tpu_custom_call.1} parent=63 // pred_fallthru
          _
        // Predicated region
        $region77: #{tpu_custom_call.1} parent=63 // pred_check
          %p471 = pneg %p127
        $region78: #{tpu_custom_call.1} parent=63 // pred_check_branch
          %473 = sbr.rel (%p471) target = $region80
        $region79: #{tpu_custom_call.1} parent=63 // pred_region
          %474 = dma.done [#allocation9], 1024
        $region80: #{tpu_custom_call.1} parent=63 // pred_fallthru
          _
        // Predicated region
        $region81: #{tpu_custom_call.1} parent=63 // pred_check
          %p475 = pneg %p169
        $region82: #{tpu_custom_call.1} parent=63 // pred_check_branch
          %477 = sbr.rel (%p475) target = $region84
        $region83: #{tpu_custom_call.1} parent=63 // pred_region
          %478 = dma.done [#allocation9], 1024
        $region84: #{tpu_custom_call.1} parent=63 // pred_fallthru
          _
        // Predicated region
        $region85: #{tpu_custom_call.1} parent=63 // pred_check
          %p479 = pneg %p211
        $region86: #{tpu_custom_call.1} parent=63 // pred_check_branch
          %481 = sbr.rel (%p479) target = $region88
        $region87: #{tpu_custom_call.1} parent=63 // pred_region
          %482 = dma.done [#allocation12], 1024
        $region88: #{tpu_custom_call.1} parent=63 // pred_fallthru
          _
        // Predicated region
        $region89: #{tpu_custom_call.1} parent=63 // pred_check
          %p483 = pneg %p253
        $region90: #{tpu_custom_call.1} parent=63 // pred_check_branch
          %485 = sbr.rel (%p483) target = $region92
        $region91: #{tpu_custom_call.1} parent=63 // pred_region
          %486 = dma.done [#allocation12], 1024
        $region92: #{tpu_custom_call.1} parent=63 // pred_fallthru
          _
        %s487 = sand.u32 %s41, 1
        %s488 = scalar_lea.sflag [#allocation3], %s487
        %s489 = sand.u32 %s41, 1
        %s490 = smul.addr %s489, 8
        %s491 = scalar_lea.vmem [#allocation2], %s490
        %p492 = pneg %p54
        %p493 = pneg %p51
        %s494 = sand.u32 %s33, 1
        %s495 = scalar_lea.sflag [#allocation6], %s494
        %s496 = sand.u32 %s67, 1
        %s497 = smul.addr %s496, 8
        %s498 = scalar_lea.vmem [#allocation5], %s497
        %p499 = pneg %p80
        %p500 = pneg %p77
        %s501 = sand.u32 %s33, 1
        %s502 = scalar_lea.sflag [#allocation6], %s501
        %s503 = sand.u32 %s93, 1
        %s504 = smul.addr %s503, 8
        %s505 = scalar_lea.vmem [#allocation7], %s504
        %p506 = pneg %p106
        %p507 = pneg %p103
        %p508 = pneg %p127
        %p509 = pneg %p124
        %p510 = pneg %p148
        %p511 = pneg %p145
        %p512 = pneg %p169
        %p513 = pneg %p166
        %p514 = pneg %p190
        %p515 = pneg %p187
        %p516 = pneg %p211
        %p517 = pneg %p208
        %p518 = pneg %p232
        %p519 = pneg %p229
        %p520 = pneg %p253
        %p521 = pneg %p250
        %p522 = pneg %p274
        %p523 = pneg %p271
        %p524 = pneg %p300
        %p525 = pneg %p297
        %s526 = sand.u32 %s287, 1
        %s527 = scalar_lea.sflag [#allocation4], %s526
        %s528 = sand.u32 %s287, 1
        %s529 = smul.addr %s528, 8
        %s530 = scalar_lea.vmem [#allocation14], %s529
        %v531 = vld [vmem:[%s448] sm:$0xff]
        %v532 = vld [vmem:[%s457] sm:$0xff]
        %v533 = vld [vmem:[%s466] sm:$0xff]
        %v534 = vld [vmem:[#allocation8] sm:$0xff]
        %v535 = vld [vmem:[#allocation8 + $0x8] sm:$0xff]
        %v536 = vld [vmem:[#allocation8 + $0x10] sm:$0xff]
        %v537 = vld [vmem:[#allocation8 + $0x18] sm:$0xff]
        %v538 = vld [vmem:[#allocation8 + $0x20] sm:$0xff]
        %v539 = vld [vmem:[#allocation8 + $0x28] sm:$0xff]
        %v540 = vld [vmem:[#allocation8 + $0x30] sm:$0xff]
        %v541 = vld [vmem:[#allocation8 + $0x38] sm:$0xff]
        %v542 = vld [vmem:[%s4] sm:$0x1]
        %v544 = vlaneseq
        %v545 = vshrl.u32 %v544, 7
        %v546 = vsub.s32 0, %v545
        %v547 = vrot.slane %v542, %v546
        %vm549 = vcmask 523264
        %v551 = vsel %vm549, %v531, 0
        %553 = vmatprep.subr.mxu0 0.0
        %554 = vmatpush1.msra.mxu0 %v534
        %555 = vmatprep.subr.mxu0 0.0
        %556 = vmatpush1.msra.mxu0 %v535
        %557 = vmatprep.subr.mxu0 0.0
        %558 = vmatpush1.msra.mxu0 %v536
        %559 = vmatprep.subr.mxu0 0.0
        %560 = vmatpush1.msra.mxu0 %v537
        %561 = vmatprep.subr.mxu0 0.0
        %562 = vmatpush1.msra.mxu0 %v538
        %563 = vmatprep.subr.mxu0 0.0
        %564 = vmatpush1.msra.mxu0 %v539
        %565 = vmatprep.subr.mxu0 0.0
        %566 = vmatpush1.msra.mxu0 %v540
        %567 = vmatprep.subr.mxu0 0.0
        %568 = vmatpush1.msra.mxu0 %v541
        %569 = vmatprep.subr.mxu0 0.0
        %570 = vmatpush1.msra.mxu0 0.0
        %571 = vmatprep.subr.mxu0 0.0
        %572 = vmatpush1.msra.mxu0 0.0
        %573 = vmatprep.subr.mxu0 0.0
        %574 = vmatpush1.msra.mxu0 0.0
        %575 = vmatprep.subr.mxu0 0.0
        %576 = vmatpush1.msra.mxu0 0.0
        %577 = vmatprep.subr.mxu0 0.0
        %578 = vmatpush1.msra.mxu0 0.0
        %579 = vmatprep.subr.mxu0 0.0
        %580 = vmatpush1.msra.mxu0 0.0
        %581 = vmatprep.subr.mxu0 0.0
        %582 = vmatpush1.msra.mxu0 0.0
        %583 = vmatprep.subr.mxu0 0.0
        %584 = vmatpush1.msra.mxu0 0.0
        %585 = vmatprep.subr.mxu0 0.0
        %586 = vmatpush1.msra.mxu0 0.0
        %587 = vmatprep.subr.mxu0 0.0
        %588 = vmatpush1.msra.mxu0 0.0
        %589 = vmatprep.subr.mxu0 0.0
        %590 = vmatpush1.msra.mxu0 0.0
        %591 = vmatprep.subr.mxu0 0.0
        %592 = vmatpush1.msra.mxu0 0.0
        %593 = vmatprep.subr.mxu0 0.0
        %594 = vmatpush1.msra.mxu0 0.0
        %595 = vmatprep.subr.mxu0 0.0
        %596 = vmatpush1.msra.mxu0 0.0
        %597 = vmatprep.subr.mxu0 0.0
        %598 = vmatpush1.msra.mxu0 0.0
        %599 = vmatprep.subr.mxu0 0.0
        %600 = vmatpush1.msra.mxu0 0.0
        %601 = vmatprep.subr.mxu0 0.0
        %602 = vmatpush1.msra.mxu0 0.0
        %603 = vmatprep.subr.mxu0 0.0
        %604 = vmatpush1.msra.mxu0 0.0
        %605 = vmatprep.subr.mxu0 0.0
        %606 = vmatpush1.msra.mxu0 0.0
        %607 = vmatprep.subr.mxu0 0.0
        %608 = vmatpush1.msra.mxu0 0.0
        %609 = vmatprep.subr.mxu0 0.0
        %610 = vmatpush1.msra.mxu0 0.0
        %611 = vmatprep.subr.mxu0 0.0
        %612 = vmatpush1.msra.mxu0 0.0
        %613 = vmatprep.subr.mxu0 0.0
        %614 = vmatpush1.msra.mxu0 0.0
        %615 = vmatprep.subr.mxu0 0.0
        %616 = vmatpush1.msra.mxu0 0.0
        %617 = vmatprep.mubr.f32.mxu0 0.0
        %618 = vmatmul.mubr.f32.gmra.mrb[0].mxu0 %v551
        %v619 = vpop.f32.mrb[0].mxu0
        %v620 = vadd.f32 %v547, %v619
        %v621 = vpop.f32.mrb[0].mxu0
        %622 = vdwg.mxu0
        %v623 = vld [vmem:[#allocation10] sm:$0xff]
        %v624 = vld [vmem:[#allocation10 + $0x8] sm:$0xff]
        %v625 = vld [vmem:[#allocation10 + $0x10] sm:$0xff]
        %v626 = vld [vmem:[#allocation10 + $0x18] sm:$0xff]
        %v627 = vld [vmem:[#allocation10 + $0x20] sm:$0xff]
        %v628 = vld [vmem:[#allocation10 + $0x28] sm:$0xff]
        %v629 = vld [vmem:[#allocation10 + $0x30] sm:$0xff]
        %v630 = vld [vmem:[#allocation10 + $0x38] sm:$0xff]
        %v631 = vld [vmem:[%s6] sm:$0x1]
        %v633 = vlaneseq
        %v634 = vshrl.u32 %v633, 7
        %v635 = vsub.s32 0, %v634
        %v636 = vrot.slane %v631, %v635
        %v639 = vsel %vm549, %v532, 0
        %641 = vmatprep.subr.mxu0 0.0
        %642 = vmatpush1.msra.mxu0 %v623
        %643 = vmatprep.subr.mxu0 0.0
        %644 = vmatpush1.msra.mxu0 %v624
        %645 = vmatprep.subr.mxu0 0.0
        %646 = vmatpush1.msra.mxu0 %v625
        %647 = vmatprep.subr.mxu0 0.0
        %648 = vmatpush1.msra.mxu0 %v626
        %649 = vmatprep.subr.mxu0 0.0
        %650 = vmatpush1.msra.mxu0 %v627
        %651 = vmatprep.subr.mxu0 0.0
        %652 = vmatpush1.msra.mxu0 %v628
        %653 = vmatprep.subr.mxu0 0.0
        %654 = vmatpush1.msra.mxu0 %v629
        %655 = vmatprep.subr.mxu0 0.0
        %656 = vmatpush1.msra.mxu0 %v630
        %657 = vmatprep.subr.mxu0 0.0
        %658 = vmatpush1.msra.mxu0 0.0
        %659 = vmatprep.subr.mxu0 0.0
        %660 = vmatpush1.msra.mxu0 0.0
        %661 = vmatprep.subr.mxu0 0.0
        %662 = vmatpush1.msra.mxu0 0.0
        %663 = vmatprep.subr.mxu0 0.0
        %664 = vmatpush1.msra.mxu0 0.0
        %665 = vmatprep.subr.mxu0 0.0
        %666 = vmatpush1.msra.mxu0 0.0
        %667 = vmatprep.subr.mxu0 0.0
        %668 = vmatpush1.msra.mxu0 0.0
        %669 = vmatprep.subr.mxu0 0.0
        %670 = vmatpush1.msra.mxu0 0.0
        %671 = vmatprep.subr.mxu0 0.0
        %672 = vmatpush1.msra.mxu0 0.0
        %673 = vmatprep.subr.mxu0 0.0
        %674 = vmatpush1.msra.mxu0 0.0
        %675 = vmatprep.subr.mxu0 0.0
        %676 = vmatpush1.msra.mxu0 0.0
        %677 = vmatprep.subr.mxu0 0.0
        %678 = vmatpush1.msra.mxu0 0.0
        %679 = vmatprep.subr.mxu0 0.0
        %680 = vmatpush1.msra.mxu0 0.0
        %681 = vmatprep.subr.mxu0 0.0
        %682 = vmatpush1.msra.mxu0 0.0
        %683 = vmatprep.subr.mxu0 0.0
        %684 = vmatpush1.msra.mxu0 0.0
        %685 = vmatprep.subr.mxu0 0.0
        %686 = vmatpush1.msra.mxu0 0.0
        %687 = vmatprep.subr.mxu0 0.0
        %688 = vmatpush1.msra.mxu0 0.0
        %689 = vmatprep.subr.mxu0 0.0
        %690 = vmatpush1.msra.mxu0 0.0
        %691 = vmatprep.subr.mxu0 0.0
        %692 = vmatpush1.msra.mxu0 0.0
        %693 = vmatprep.subr.mxu0 0.0
        %694 = vmatpush1.msra.mxu0 0.0
        %695 = vmatprep.subr.mxu0 0.0
        %696 = vmatpush1.msra.mxu0 0.0
        %697 = vmatprep.subr.mxu0 0.0
        %698 = vmatpush1.msra.mxu0 0.0
        %699 = vmatprep.subr.mxu0 0.0
        %700 = vmatpush1.msra.mxu0 0.0
        %701 = vmatprep.subr.mxu0 0.0
        %702 = vmatpush1.msra.mxu0 0.0
        %703 = vmatprep.subr.mxu0 0.0
        %704 = vmatpush1.msra.mxu0 0.0
        %705 = vmatprep.mubr.f32.mxu0 0.0
        %706 = vmatmul.mubr.f32.gmra.mrb[0].mxu0 %v639
        %v707 = vpop.f32.mrb[0].mxu0
        %v708 = vadd.f32 %v636, %v707
        %v709 = vpop.f32.mrb[0].mxu0
        %710 = vdwg.mxu0
        %v711 = vld [vmem:[#allocation11] sm:$0xff]
        %v712 = vld [vmem:[#allocation11 + $0x8] sm:$0xff]
        %v713 = vld [vmem:[#allocation11 + $0x10] sm:$0xff]
        %v714 = vld [vmem:[#allocation11 + $0x18] sm:$0xff]
        %v715 = vld [vmem:[#allocation11 + $0x20] sm:$0xff]
        %v716 = vld [vmem:[#allocation11 + $0x28] sm:$0xff]
        %v717 = vld [vmem:[#allocation11 + $0x30] sm:$0xff]
        %v718 = vld [vmem:[#allocation11 + $0x38] sm:$0xff]
        %v719 = vld [vmem:[%s8] sm:$0x1]
        %v721 = vlaneseq
        %v722 = vshrl.u32 %v721, 7
        %v723 = vsub.s32 0, %v722
        %v724 = vrot.slane %v719, %v723
        %v727 = vsel %vm549, %v533, 0
        %729 = vmatprep.subr.mxu0 0.0
        %730 = vmatpush1.msra.mxu0 %v711
        %731 = vmatprep.subr.mxu0 0.0
        %732 = vmatpush1.msra.mxu0 %v712
        %733 = vmatprep.subr.mxu0 0.0
        %734 = vmatpush1.msra.mxu0 %v713
        %735 = vmatprep.subr.mxu0 0.0
        %736 = vmatpush1.msra.mxu0 %v714
        %737 = vmatprep.subr.mxu0 0.0
        %738 = vmatpush1.msra.mxu0 %v715
        %739 = vmatprep.subr.mxu0 0.0
        %740 = vmatpush1.msra.mxu0 %v716
        %741 = vmatprep.subr.mxu0 0.0
        %742 = vmatpush1.msra.mxu0 %v717
        %743 = vmatprep.subr.mxu0 0.0
        %744 = vmatpush1.msra.mxu0 %v718
        %745 = vmatprep.subr.mxu0 0.0
        %746 = vmatpush1.msra.mxu0 0.0
        %747 = vmatprep.subr.mxu0 0.0
        %748 = vmatpush1.msra.mxu0 0.0
        %749 = vmatprep.subr.mxu0 0.0
        %750 = vmatpush1.msra.mxu0 0.0
        %751 = vmatprep.subr.mxu0 0.0
        %752 = vmatpush1.msra.mxu0 0.0
        %753 = vmatprep.subr.mxu0 0.0
        %754 = vmatpush1.msra.mxu0 0.0
        %755 = vmatprep.subr.mxu0 0.0
        %756 = vmatpush1.msra.mxu0 0.0
        %757 = vmatprep.subr.mxu0 0.0
        %758 = vmatpush1.msra.mxu0 0.0
        %759 = vmatprep.subr.mxu0 0.0
        %760 = vmatpush1.msra.mxu0 0.0
        %761 = vmatprep.subr.mxu0 0.0
        %762 = vmatpush1.msra.mxu0 0.0
        %763 = vmatprep.subr.mxu0 0.0
        %764 = vmatpush1.msra.mxu0 0.0
        %765 = vmatprep.subr.mxu0 0.0
        %766 = vmatpush1.msra.mxu0 0.0
        %767 = vmatprep.subr.mxu0 0.0
        %768 = vmatpush1.msra.mxu0 0.0
        %769 = vmatprep.subr.mxu0 0.0
        %770 = vmatpush1.msra.mxu0 0.0
        %771 = vmatprep.subr.mxu0 0.0
        %772 = vmatpush1.msra.mxu0 0.0
        %773 = vmatprep.subr.mxu0 0.0
        %774 = vmatpush1.msra.mxu0 0.0
        %775 = vmatprep.subr.mxu0 0.0
        %776 = vmatpush1.msra.mxu0 0.0
        %777 = vmatprep.subr.mxu0 0.0
        %778 = vmatpush1.msra.mxu0 0.0
        %779 = vmatprep.subr.mxu0 0.0
        %780 = vmatpush1.msra.mxu0 0.0
        %781 = vmatprep.subr.mxu0 0.0
        %782 = vmatpush1.msra.mxu0 0.0
        %783 = vmatprep.subr.mxu0 0.0
        %784 = vmatpush1.msra.mxu0 0.0
        %785 = vmatprep.subr.mxu0 0.0
        %786 = vmatpush1.msra.mxu0 0.0
        %787 = vmatprep.subr.mxu0 0.0
        %788 = vmatpush1.msra.mxu0 0.0
        %789 = vmatprep.subr.mxu0 0.0
        %790 = vmatpush1.msra.mxu0 0.0
        %791 = vmatprep.subr.mxu0 0.0
        %792 = vmatpush1.msra.mxu0 0.0
        %793 = vmatprep.mubr.f32.mxu0 0.0
        %794 = vmatmul.mubr.f32.gmra.mrb[0].mxu0 %v727
        %v795 = vpop.f32.mrb[0].mxu0
        %v796 = vadd.f32 %v724, %v795
        %v797 = vpop.f32.mrb[0].mxu0
        %798 = vdwg.mxu0
        %vm799 = vcmask 130048
        %v801 = vsel %vm799, %v620, 0
        %v804 = vsel %vm799, %v708, 0
        %806 = vmatprep.subr.mxu0 0.0
        %807 = vmatpush1.xpose.msra.mxu0 %v804
        %808 = vmatprep.subr.mxu0 0.0
        %809 = vmatpush1.xpose.msra.mxu0 0.0
        %810 = vmatprep.subr.mxu0 0.0
        %811 = vmatpush1.xpose.msra.mxu0 0.0
        %812 = vmatprep.subr.mxu0 0.0
        %813 = vmatpush1.xpose.msra.mxu0 0.0
        %814 = vmatprep.subr.mxu0 0.0
        %815 = vmatpush1.xpose.msra.mxu0 0.0
        %816 = vmatprep.subr.mxu0 0.0
        %817 = vmatpush1.xpose.msra.mxu0 0.0
        %818 = vmatprep.subr.mxu0 0.0
        %819 = vmatpush1.xpose.msra.mxu0 0.0
        %820 = vmatprep.subr.mxu0 0.0
        %821 = vmatpush1.xpose.msra.mxu0 0.0
        %822 = vmatprep.subr.mxu0 0.0
        %823 = vmatpush1.xpose.msra.mxu0 0.0
        %824 = vmatprep.subr.mxu0 0.0
        %825 = vmatpush1.xpose.msra.mxu0 0.0
        %826 = vmatprep.subr.mxu0 0.0
        %827 = vmatpush1.xpose.msra.mxu0 0.0
        %828 = vmatprep.subr.mxu0 0.0
        %829 = vmatpush1.xpose.msra.mxu0 0.0
        %830 = vmatprep.subr.mxu0 0.0
        %831 = vmatpush1.xpose.msra.mxu0 0.0
        %832 = vmatprep.subr.mxu0 0.0
        %833 = vmatpush1.xpose.msra.mxu0 0.0
        %834 = vmatprep.subr.mxu0 0.0
        %835 = vmatpush1.xpose.msra.mxu0 0.0
        %836 = vmatprep.subr.mxu0 0.0
        %837 = vmatpush1.xpose.msra.mxu0 0.0
        %838 = vmatprep.subr.mxu0 0.0
        %839 = vmatpush1.xpose.msra.mxu0 0.0
        %840 = vmatprep.subr.mxu0 0.0
        %841 = vmatpush1.xpose.msra.mxu0 0.0
        %842 = vmatprep.subr.mxu0 0.0
        %843 = vmatpush1.xpose.msra.mxu0 0.0
        %844 = vmatprep.subr.mxu0 0.0
        %845 = vmatpush1.xpose.msra.mxu0 0.0
        %846 = vmatprep.subr.mxu0 0.0
        %847 = vmatpush1.xpose.msra.mxu0 0.0
        %848 = vmatprep.subr.mxu0 0.0
        %849 = vmatpush1.xpose.msra.mxu0 0.0
        %850 = vmatprep.subr.mxu0 0.0
        %851 = vmatpush1.xpose.msra.mxu0 0.0
        %852 = vmatprep.subr.mxu0 0.0
        %853 = vmatpush1.xpose.msra.mxu0 0.0
        %854 = vmatprep.subr.mxu0 0.0
        %855 = vmatpush1.xpose.msra.mxu0 0.0
        %856 = vmatprep.subr.mxu0 0.0
        %857 = vmatpush1.xpose.msra.mxu0 0.0
        %858 = vmatprep.subr.mxu0 0.0
        %859 = vmatpush1.xpose.msra.mxu0 0.0
        %860 = vmatprep.subr.mxu0 0.0
        %861 = vmatpush1.xpose.msra.mxu0 0.0
        %862 = vmatprep.subr.mxu0 0.0
        %863 = vmatpush1.xpose.msra.mxu0 0.0
        %864 = vmatprep.subr.mxu0 0.0
        %865 = vmatpush1.xpose.msra.mxu0 0.0
        %866 = vmatprep.subr.mxu0 0.0
        %867 = vmatpush1.xpose.msra.mxu0 0.0
        %868 = vmatprep.subr.mxu0 0.0
        %869 = vmatpush1.xpose.msra.mxu0 0.0
        %870 = vmatprep.mubr.f32.mxu0 0.0
        %871 = vmatmul.mubr.f32.gmra.mrb[0].mxu0 %v801
        %v872 = vpop.f32.mrb[0].mxu0
        %v873 = vadd.f32 0.0, %v872
        %v874 = vpop.f32.mrb[0].mxu0
        %875 = vdwg.mxu0
        %v876 = vmul.f32 %v873, 0.25
        %vm877 = vcmask 64512
        %v878 = vsel %vm877, %v876, -inf
        %879 = vmax.xlane.f32.xlu0 %v878
        %v880 = vpop.xlane.xlu0 %879
        %v881 = vsub.f32 %v876, %v880
        %v882 = vmul.f32 %v881, 1.442695
        %v883 = vpow.pop %v882
        %v884 = vsel %vm877, %v883, 0.0
        %885 = vadd.xlane.f32.xlu0 %v884
        %v886 = vpop.xlane.xlu0 %885
        %v887 = vrcp.pop %v886
        %v888 = vmul.f32 %v883, %v887
        %v890 = vsel %vm877, %v888, 0
        %892 = vmatprep.subr.mxu0 0.0
        %893 = vmatpush1.msra.mxu0 %v796
        %894 = vmatprep.subr.mxu0 0.0
        %895 = vmatpush1.msra.mxu0 0.0
        %896 = vmatprep.subr.mxu0 0.0
        %897 = vmatpush1.msra.mxu0 0.0
        %898 = vmatprep.subr.mxu0 0.0
        %899 = vmatpush1.msra.mxu0 0.0
        %900 = vmatprep.subr.mxu0 0.0
        %901 = vmatpush1.msra.mxu0 0.0
        %902 = vmatprep.subr.mxu0 0.0
        %903 = vmatpush1.msra.mxu0 0.0
        %904 = vmatprep.subr.mxu0 0.0
        %905 = vmatpush1.msra.mxu0 0.0
        %906 = vmatprep.subr.mxu0 0.0
        %907 = vmatpush1.msra.mxu0 0.0
        %908 = vmatprep.subr.mxu0 0.0
        %909 = vmatpush1.msra.mxu0 0.0
        %910 = vmatprep.subr.mxu0 0.0
        %911 = vmatpush1.msra.mxu0 0.0
        %912 = vmatprep.subr.mxu0 0.0
        %913 = vmatpush1.msra.mxu0 0.0
        %914 = vmatprep.subr.mxu0 0.0
        %915 = vmatpush1.msra.mxu0 0.0
        %916 = vmatprep.subr.mxu0 0.0
        %917 = vmatpush1.msra.mxu0 0.0
        %918 = vmatprep.subr.mxu0 0.0
        %919 = vmatpush1.msra.mxu0 0.0
        %920 = vmatprep.subr.mxu0 0.0
        %921 = vmatpush1.msra.mxu0 0.0
        %922 = vmatprep.subr.mxu0 0.0
        %923 = vmatpush1.msra.mxu0 0.0
        %924 = vmatprep.subr.mxu0 0.0
        %925 = vmatpush1.msra.mxu0 0.0
        %926 = vmatprep.subr.mxu0 0.0
        %927 = vmatpush1.msra.mxu0 0.0
        %928 = vmatprep.subr.mxu0 0.0
        %929 = vmatpush1.msra.mxu0 0.0
        %930 = vmatprep.subr.mxu0 0.0
        %931 = vmatpush1.msra.mxu0 0.0
        %932 = vmatprep.subr.mxu0 0.0
        %933 = vmatpush1.msra.mxu0 0.0
        %934 = vmatprep.subr.mxu0 0.0
        %935 = vmatpush1.msra.mxu0 0.0
        %936 = vmatprep.subr.mxu0 0.0
        %937 = vmatpush1.msra.mxu0 0.0
        %938 = vmatprep.subr.mxu0 0.0
        %939 = vmatpush1.msra.mxu0 0.0
        %940 = vmatprep.subr.mxu0 0.0
        %941 = vmatpush1.msra.mxu0 0.0
        %942 = vmatprep.subr.mxu0 0.0
        %943 = vmatpush1.msra.mxu0 0.0
        %944 = vmatprep.subr.mxu0 0.0
        %945 = vmatpush1.msra.mxu0 0.0
        %946 = vmatprep.subr.mxu0 0.0
        %947 = vmatpush1.msra.mxu0 0.0
        %948 = vmatprep.subr.mxu0 0.0
        %949 = vmatpush1.msra.mxu0 0.0
        %950 = vmatprep.subr.mxu0 0.0
        %951 = vmatpush1.msra.mxu0 0.0
        %952 = vmatprep.subr.mxu0 0.0
        %953 = vmatpush1.msra.mxu0 0.0
        %954 = vmatprep.subr.mxu0 0.0
        %955 = vmatpush1.msra.mxu0 0.0
        %956 = vmatprep.mubr.f32.mxu0 0.0
        %957 = vmatmul.mubr.f32.gmra.mrb[0].mxu0 %v890
        %v958 = vpop.f32.mrb[0].mxu0
        %v959 = vadd.f32 0.0, %v958
        %v960 = vpop.f32.mrb[0].mxu0
        %961 = vdwg.mxu0
        %962 = vrot.lane.b32.xlu0 %v620, 112
        %v963 = vpop.permute.xlu0 %962
        %964 = vrot.lane.b32.xlu0 %v708, 112
        %v965 = vpop.permute.xlu0 %964
        %v966 = vsel %vm799, %v963, 0
        %v968 = vsel %vm799, %v965, 0
        %970 = vmatprep.subr.mxu0 0.0
        %971 = vmatpush1.xpose.msra.mxu0 %v968
        %972 = vmatprep.subr.mxu0 0.0
        %973 = vmatpush1.xpose.msra.mxu0 0.0
        %974 = vmatprep.subr.mxu0 0.0
        %975 = vmatpush1.xpose.msra.mxu0 0.0
        %976 = vmatprep.subr.mxu0 0.0
        %977 = vmatpush1.xpose.msra.mxu0 0.0
        %978 = vmatprep.subr.mxu0 0.0
        %979 = vmatpush1.xpose.msra.mxu0 0.0
        %980 = vmatprep.subr.mxu0 0.0
        %981 = vmatpush1.xpose.msra.mxu0 0.0
        %982 = vmatprep.subr.mxu0 0.0
        %983 = vmatpush1.xpose.msra.mxu0 0.0
        %984 = vmatprep.subr.mxu0 0.0
        %985 = vmatpush1.xpose.msra.mxu0 0.0
        %986 = vmatprep.subr.mxu0 0.0
        %987 = vmatpush1.xpose.msra.mxu0 0.0
        %988 = vmatprep.subr.mxu0 0.0
        %989 = vmatpush1.xpose.msra.mxu0 0.0
        %990 = vmatprep.subr.mxu0 0.0
        %991 = vmatpush1.xpose.msra.mxu0 0.0
        %992 = vmatprep.subr.mxu0 0.0
        %993 = vmatpush1.xpose.msra.mxu0 0.0
        %994 = vmatprep.subr.mxu0 0.0
        %995 = vmatpush1.xpose.msra.mxu0 0.0
        %996 = vmatprep.subr.mxu0 0.0
        %997 = vmatpush1.xpose.msra.mxu0 0.0
        %998 = vmatprep.subr.mxu0 0.0
        %999 = vmatpush1.xpose.msra.mxu0 0.0
        %1000 = vmatprep.subr.mxu0 0.0
        %1001 = vmatpush1.xpose.msra.mxu0 0.0
        %1002 = vmatprep.subr.mxu0 0.0
        %1003 = vmatpush1.xpose.msra.mxu0 0.0
        %1004 = vmatprep.subr.mxu0 0.0
        %1005 = vmatpush1.xpose.msra.mxu0 0.0
        %1006 = vmatprep.subr.mxu0 0.0
        %1007 = vmatpush1.xpose.msra.mxu0 0.0
        %1008 = vmatprep.subr.mxu0 0.0
        %1009 = vmatpush1.xpose.msra.mxu0 0.0
        %1010 = vmatprep.subr.mxu0 0.0
        %1011 = vmatpush1.xpose.msra.mxu0 0.0
        %1012 = vmatprep.subr.mxu0 0.0
        %1013 = vmatpush1.xpose.msra.mxu0 0.0
        %1014 = vmatprep.subr.mxu0 0.0
        %1015 = vmatpush1.xpose.msra.mxu0 0.0
        %1016 = vmatprep.subr.mxu0 0.0
        %1017 = vmatpush1.xpose.msra.mxu0 0.0
        %1018 = vmatprep.subr.mxu0 0.0
        %1019 = vmatpush1.xpose.msra.mxu0 0.0
        %1020 = vmatprep.subr.mxu0 0.0
        %1021 = vmatpush1.xpose.msra.mxu0 0.0
        %1022 = vmatprep.subr.mxu0 0.0
        %1023 = vmatpush1.xpose.msra.mxu0 0.0
        %1024 = vmatprep.subr.mxu0 0.0
        %1025 = vmatpush1.xpose.msra.mxu0 0.0
        %1026 = vmatprep.subr.mxu0 0.0
        %1027 = vmatpush1.xpose.msra.mxu0 0.0
        %1028 = vmatprep.subr.mxu0 0.0
        %1029 = vmatpush1.xpose.msra.mxu0 0.0
        %1030 = vmatprep.subr.mxu0 0.0
        %1031 = vmatpush1.xpose.msra.mxu0 0.0
        %1032 = vmatprep.subr.mxu0 0.0
        %1033 = vmatpush1.xpose.msra.mxu0 0.0
        %1034 = vmatprep.mubr.f32.mxu0 0.0
        %1035 = vmatmul.mubr.f32.gmra.mrb[0].mxu0 %v966
        %v1036 = vpop.f32.mrb[0].mxu0
        %v1037 = vadd.f32 0.0, %v1036
        %v1038 = vpop.f32.mrb[0].mxu0
        %1039 = vdwg.mxu0
        %v1040 = vmul.f32 %v1037, 0.25
        %v1041 = vsel %vm877, %v1040, -inf
        %1042 = vmax.xlane.f32.xlu0 %v1041
        %v1043 = vpop.xlane.xlu0 %1042
        %v1044 = vsub.f32 %v1040, %v1043
        %v1045 = vmul.f32 %v1044, 1.442695
        %v1046 = vpow.pop %v1045
        %v1047 = vsel %vm877, %v1046, 0.0
        %1048 = vadd.xlane.f32.xlu0 %v1047
        %v1049 = vpop.xlane.xlu0 %1048
        %v1050 = vrcp.pop %v1049
        %v1051 = vmul.f32 %v1046, %v1050
        %1053 = vrot.lane.b32.xlu0 %v796, 112
        %v1054 = vpop.permute.xlu0 %1053
        %v1057 = vsel %vm877, %v1051, 0
        %1059 = vmatprep.subr.mxu0 0.0
        %1060 = vmatpush1.msra.mxu0 %v1054
        %1061 = vmatprep.subr.mxu0 0.0
        %1062 = vmatpush1.msra.mxu0 0.0
        %1063 = vmatprep.subr.mxu0 0.0
        %1064 = vmatpush1.msra.mxu0 0.0
        %1065 = vmatprep.subr.mxu0 0.0
        %1066 = vmatpush1.msra.mxu0 0.0
        %1067 = vmatprep.subr.mxu0 0.0
        %1068 = vmatpush1.msra.mxu0 0.0
        %1069 = vmatprep.subr.mxu0 0.0
        %1070 = vmatpush1.msra.mxu0 0.0
        %1071 = vmatprep.subr.mxu0 0.0
        %1072 = vmatpush1.msra.mxu0 0.0
        %1073 = vmatprep.subr.mxu0 0.0
        %1074 = vmatpush1.msra.mxu0 0.0
        %1075 = vmatprep.subr.mxu0 0.0
        %1076 = vmatpush1.msra.mxu0 0.0
        %1077 = vmatprep.subr.mxu0 0.0
        %1078 = vmatpush1.msra.mxu0 0.0
        %1079 = vmatprep.subr.mxu0 0.0
        %1080 = vmatpush1.msra.mxu0 0.0
        %1081 = vmatprep.subr.mxu0 0.0
        %1082 = vmatpush1.msra.mxu0 0.0
        %1083 = vmatprep.subr.mxu0 0.0
        %1084 = vmatpush1.msra.mxu0 0.0
        %1085 = vmatprep.subr.mxu0 0.0
        %1086 = vmatpush1.msra.mxu0 0.0
        %1087 = vmatprep.subr.mxu0 0.0
        %1088 = vmatpush1.msra.mxu0 0.0
        %1089 = vmatprep.subr.mxu0 0.0
        %1090 = vmatpush1.msra.mxu0 0.0
        %1091 = vmatprep.subr.mxu0 0.0
        %1092 = vmatpush1.msra.mxu0 0.0
        %1093 = vmatprep.subr.mxu0 0.0
        %1094 = vmatpush1.msra.mxu0 0.0
        %1095 = vmatprep.subr.mxu0 0.0
        %1096 = vmatpush1.msra.mxu0 0.0
        %1097 = vmatprep.subr.mxu0 0.0
        %1098 = vmatpush1.msra.mxu0 0.0
        %1099 = vmatprep.subr.mxu0 0.0
        %1100 = vmatpush1.msra.mxu0 0.0
        %1101 = vmatprep.subr.mxu0 0.0
        %1102 = vmatpush1.msra.mxu0 0.0
        %1103 = vmatprep.subr.mxu0 0.0
        %1104 = vmatpush1.msra.mxu0 0.0
        %1105 = vmatprep.subr.mxu0 0.0
        %1106 = vmatpush1.msra.mxu0 0.0
        %1107 = vmatprep.subr.mxu0 0.0
        %1108 = vmatpush1.msra.mxu0 0.0
        %1109 = vmatprep.subr.mxu0 0.0
        %1110 = vmatpush1.msra.mxu0 0.0
        %1111 = vmatprep.subr.mxu0 0.0
        %1112 = vmatpush1.msra.mxu0 0.0
        %1113 = vmatprep.subr.mxu0 0.0
        %1114 = vmatpush1.msra.mxu0 0.0
        %1115 = vmatprep.subr.mxu0 0.0
        %1116 = vmatpush1.msra.mxu0 0.0
        %1117 = vmatprep.subr.mxu0 0.0
        %1118 = vmatpush1.msra.mxu0 0.0
        %1119 = vmatprep.subr.mxu0 0.0
        %1120 = vmatpush1.msra.mxu0 0.0
        %1121 = vmatprep.subr.mxu0 0.0
        %1122 = vmatpush1.msra.mxu0 0.0
        %1123 = vmatprep.mubr.f32.mxu0 0.0
        %1124 = vmatmul.mubr.f32.gmra.mrb[0].mxu0 %v1057
        %v1125 = vpop.f32.mrb[0].mxu0
        %v1126 = vadd.f32 0.0, %v1125
        %v1127 = vpop.f32.mrb[0].mxu0
        %1128 = vdwg.mxu0
        %1129 = vrot.lane.b32.xlu0 %v620, 96
        %v1130 = vpop.permute.xlu0 %1129
        %1131 = vrot.lane.b32.xlu0 %v708, 96
        %v1132 = vpop.permute.xlu0 %1131
        %v1133 = vsel %vm799, %v1130, 0
        %v1135 = vsel %vm799, %v1132, 0
        %1137 = vmatprep.subr.mxu0 0.0
        %1138 = vmatpush1.xpose.msra.mxu0 %v1135
        %1139 = vmatprep.subr.mxu0 0.0
        %1140 = vmatpush1.xpose.msra.mxu0 0.0
        %1141 = vmatprep.subr.mxu0 0.0
        %1142 = vmatpush1.xpose.msra.mxu0 0.0
        %1143 = vmatprep.subr.mxu0 0.0
        %1144 = vmatpush1.xpose.msra.mxu0 0.0
        %1145 = vmatprep.subr.mxu0 0.0
        %1146 = vmatpush1.xpose.msra.mxu0 0.0
        %1147 = vmatprep.subr.mxu0 0.0
        %1148 = vmatpush1.xpose.msra.mxu0 0.0
        %1149 = vmatprep.subr.mxu0 0.0
        %1150 = vmatpush1.xpose.msra.mxu0 0.0
        %1151 = vmatprep.subr.mxu0 0.0
        %1152 = vmatpush1.xpose.msra.mxu0 0.0
        %1153 = vmatprep.subr.mxu0 0.0
        %1154 = vmatpush1.xpose.msra.mxu0 0.0
        %1155 = vmatprep.subr.mxu0 0.0
        %1156 = vmatpush1.xpose.msra.mxu0 0.0
        %1157 = vmatprep.subr.mxu0 0.0
        %1158 = vmatpush1.xpose.msra.mxu0 0.0
        %1159 = vmatprep.subr.mxu0 0.0
        %1160 = vmatpush1.xpose.msra.mxu0 0.0
        %1161 = vmatprep.subr.mxu0 0.0
        %1162 = vmatpush1.xpose.msra.mxu0 0.0
        %1163 = vmatprep.subr.mxu0 0.0
        %1164 = vmatpush1.xpose.msra.mxu0 0.0
        %1165 = vmatprep.subr.mxu0 0.0
        %1166 = vmatpush1.xpose.msra.mxu0 0.0
        %1167 = vmatprep.subr.mxu0 0.0
        %1168 = vmatpush1.xpose.msra.mxu0 0.0
        %1169 = vmatprep.subr.mxu0 0.0
        %1170 = vmatpush1.xpose.msra.mxu0 0.0
        %1171 = vmatprep.subr.mxu0 0.0
        %1172 = vmatpush1.xpose.msra.mxu0 0.0
        %1173 = vmatprep.subr.mxu0 0.0
        %1174 = vmatpush1.xpose.msra.mxu0 0.0
        %1175 = vmatprep.subr.mxu0 0.0
        %1176 = vmatpush1.xpose.msra.mxu0 0.0
        %1177 = vmatprep.subr.mxu0 0.0
        %1178 = vmatpush1.xpose.msra.mxu0 0.0
        %1179 = vmatprep.subr.mxu0 0.0
        %1180 = vmatpush1.xpose.msra.mxu0 0.0
        %1181 = vmatprep.subr.mxu0 0.0
        %1182 = vmatpush1.xpose.msra.mxu0 0.0
        %1183 = vmatprep.subr.mxu0 0.0
        %1184 = vmatpush1.xpose.msra.mxu0 0.0
        %1185 = vmatprep.subr.mxu0 0.0
        %1186 = vmatpush1.xpose.msra.mxu0 0.0
        %1187 = vmatprep.subr.mxu0 0.0
        %1188 = vmatpush1.xpose.msra.mxu0 0.0
        %1189 = vmatprep.subr.mxu0 0.0
        %1190 = vmatpush1.xpose.msra.mxu0 0.0
        %1191 = vmatprep.subr.mxu0 0.0
        %1192 = vmatpush1.xpose.msra.mxu0 0.0
        %1193 = vmatprep.subr.mxu0 0.0
        %1194 = vmatpush1.xpose.msra.mxu0 0.0
        %1195 = vmatprep.subr.mxu0 0.0
        %1196 = vmatpush1.xpose.msra.mxu0 0.0
        %1197 = vmatprep.subr.mxu0 0.0
        %1198 = vmatpush1.xpose.msra.mxu0 0.0
        %1199 = vmatprep.subr.mxu0 0.0
        %1200 = vmatpush1.xpose.msra.mxu0 0.0
        %1201 = vmatprep.mubr.f32.mxu0 0.0
        %1202 = vmatmul.mubr.f32.gmra.mrb[0].mxu0 %v1133
        %v1203 = vpop.f32.mrb[0].mxu0
        %v1204 = vadd.f32 0.0, %v1203
        %v1205 = vpop.f32.mrb[0].mxu0
        %1206 = vdwg.mxu0
        %v1207 = vmul.f32 %v1204, 0.25
        %v1208 = vsel %vm877, %v1207, -inf
        %1209 = vmax.xlane.f32.xlu0 %v1208
        %v1210 = vpop.xlane.xlu0 %1209
        %v1211 = vsub.f32 %v1207, %v1210
        %v1212 = vmul.f32 %v1211, 1.442695
        %v1213 = vpow.pop %v1212
        %v1214 = vsel %vm877, %v1213, 0.0
        %1215 = vadd.xlane.f32.xlu0 %v1214
        %v1216 = vpop.xlane.xlu0 %1215
        %v1217 = vrcp.pop %v1216
        %v1218 = vmul.f32 %v1213, %v1217
        %1219 = vrot.lane.b32.xlu0 %v796, 96
        %v1220 = vpop.permute.xlu0 %1219
        %v1223 = vsel %vm877, %v1218, 0
        %1225 = vmatprep.subr.mxu0 0.0
        %1226 = vmatpush1.msra.mxu0 %v1220
        %1227 = vmatprep.subr.mxu0 0.0
        %1228 = vmatpush1.msra.mxu0 0.0
        %1229 = vmatprep.subr.mxu0 0.0
        %1230 = vmatpush1.msra.mxu0 0.0
        %1231 = vmatprep.subr.mxu0 0.0
        %1232 = vmatpush1.msra.mxu0 0.0
        %1233 = vmatprep.subr.mxu0 0.0
        %1234 = vmatpush1.msra.mxu0 0.0
        %1235 = vmatprep.subr.mxu0 0.0
        %1236 = vmatpush1.msra.mxu0 0.0
        %1237 = vmatprep.subr.mxu0 0.0
        %1238 = vmatpush1.msra.mxu0 0.0
        %1239 = vmatprep.subr.mxu0 0.0
        %1240 = vmatpush1.msra.mxu0 0.0
        %1241 = vmatprep.subr.mxu0 0.0
        %1242 = vmatpush1.msra.mxu0 0.0
        %1243 = vmatprep.subr.mxu0 0.0
        %1244 = vmatpush1.msra.mxu0 0.0
        %1245 = vmatprep.subr.mxu0 0.0
        %1246 = vmatpush1.msra.mxu0 0.0
        %1247 = vmatprep.subr.mxu0 0.0
        %1248 = vmatpush1.msra.mxu0 0.0
        %1249 = vmatprep.subr.mxu0 0.0
        %1250 = vmatpush1.msra.mxu0 0.0
        %1251 = vmatprep.subr.mxu0 0.0
        %1252 = vmatpush1.msra.mxu0 0.0
        %1253 = vmatprep.subr.mxu0 0.0
        %1254 = vmatpush1.msra.mxu0 0.0
        %1255 = vmatprep.subr.mxu0 0.0
        %1256 = vmatpush1.msra.mxu0 0.0
        %1257 = vmatprep.subr.mxu0 0.0
        %1258 = vmatpush1.msra.mxu0 0.0
        %1259 = vmatprep.subr.mxu0 0.0
        %1260 = vmatpush1.msra.mxu0 0.0
        %1261 = vmatprep.subr.mxu0 0.0
        %1262 = vmatpush1.msra.mxu0 0.0
        %1263 = vmatprep.subr.mxu0 0.0
        %1264 = vmatpush1.msra.mxu0 0.0
        %1265 = vmatprep.subr.mxu0 0.0
        %1266 = vmatpush1.msra.mxu0 0.0
        %1267 = vmatprep.subr.mxu0 0.0
        %1268 = vmatpush1.msra.mxu0 0.0
        %1269 = vmatprep.subr.mxu0 0.0
        %1270 = vmatpush1.msra.mxu0 0.0
        %1271 = vmatprep.subr.mxu0 0.0
        %1272 = vmatpush1.msra.mxu0 0.0
        %1273 = vmatprep.subr.mxu0 0.0
        %1274 = vmatpush1.msra.mxu0 0.0
        %1275 = vmatprep.subr.mxu0 0.0
        %1276 = vmatpush1.msra.mxu0 0.0
        %1277 = vmatprep.subr.mxu0 0.0
        %1278 = vmatpush1.msra.mxu0 0.0
        %1279 = vmatprep.subr.mxu0 0.0
        %1280 = vmatpush1.msra.mxu0 0.0
        %1281 = vmatprep.subr.mxu0 0.0
        %1282 = vmatpush1.msra.mxu0 0.0
        %1283 = vmatprep.subr.mxu0 0.0
        %1284 = vmatpush1.msra.mxu0 0.0
        %1285 = vmatprep.subr.mxu0 0.0
        %1286 = vmatpush1.msra.mxu0 0.0
        %1287 = vmatprep.subr.mxu0 0.0
        %1288 = vmatpush1.msra.mxu0 0.0
        %1289 = vmatprep.mubr.f32.mxu0 0.0
        %1290 = vmatmul.mubr.f32.gmra.mrb[0].mxu0 %v1223
        %v1291 = vpop.f32.mrb[0].mxu0
        %v1292 = vadd.f32 0.0, %v1291
        %v1293 = vpop.f32.mrb[0].mxu0
        %1294 = vdwg.mxu0
        %1295 = vrot.lane.b32.xlu0 %v620, 80
        %v1296 = vpop.permute.xlu0 %1295
        %1297 = vrot.lane.b32.xlu0 %v708, 80
        %v1298 = vpop.permute.xlu0 %1297
        %v1299 = vsel %vm799, %v1296, 0
        %v1301 = vsel %vm799, %v1298, 0
        %1303 = vmatprep.subr.mxu0 0.0
        %1304 = vmatpush1.xpose.msra.mxu0 %v1301
        %1305 = vmatprep.subr.mxu0 0.0
        %1306 = vmatpush1.xpose.msra.mxu0 0.0
        %1307 = vmatprep.subr.mxu0 0.0
        %1308 = vmatpush1.xpose.msra.mxu0 0.0
        %1309 = vmatprep.subr.mxu0 0.0
        %1310 = vmatpush1.xpose.msra.mxu0 0.0
        %1311 = vmatprep.subr.mxu0 0.0
        %1312 = vmatpush1.xpose.msra.mxu0 0.0
        %1313 = vmatprep.subr.mxu0 0.0
        %1314 = vmatpush1.xpose.msra.mxu0 0.0
        %1315 = vmatprep.subr.mxu0 0.0
        %1316 = vmatpush1.xpose.msra.mxu0 0.0
        %1317 = vmatprep.subr.mxu0 0.0
        %1318 = vmatpush1.xpose.msra.mxu0 0.0
        %1319 = vmatprep.subr.mxu0 0.0
        %1320 = vmatpush1.xpose.msra.mxu0 0.0
        %1321 = vmatprep.subr.mxu0 0.0
        %1322 = vmatpush1.xpose.msra.mxu0 0.0
        %1323 = vmatprep.subr.mxu0 0.0
        %1324 = vmatpush1.xpose.msra.mxu0 0.0
        %1325 = vmatprep.subr.mxu0 0.0
        %1326 = vmatpush1.xpose.msra.mxu0 0.0
        %1327 = vmatprep.subr.mxu0 0.0
        %1328 = vmatpush1.xpose.msra.mxu0 0.0
        %1329 = vmatprep.subr.mxu0 0.0
        %1330 = vmatpush1.xpose.msra.mxu0 0.0
        %1331 = vmatprep.subr.mxu0 0.0
        %1332 = vmatpush1.xpose.msra.mxu0 0.0
        %1333 = vmatprep.subr.mxu0 0.0
        %1334 = vmatpush1.xpose.msra.mxu0 0.0
        %1335 = vmatprep.subr.mxu0 0.0
        %1336 = vmatpush1.xpose.msra.mxu0 0.0
        %1337 = vmatprep.subr.mxu0 0.0
        %1338 = vmatpush1.xpose.msra.mxu0 0.0
        %1339 = vmatprep.subr.mxu0 0.0
        %1340 = vmatpush1.xpose.msra.mxu0 0.0
        %1341 = vmatprep.subr.mxu0 0.0
        %1342 = vmatpush1.xpose.msra.mxu0 0.0
        %1343 = vmatprep.subr.mxu0 0.0
        %1344 = vmatpush1.xpose.msra.mxu0 0.0
        %1345 = vmatprep.subr.mxu0 0.0
        %1346 = vmatpush1.xpose.msra.mxu0 0.0
        %1347 = vmatprep.subr.mxu0 0.0
        %1348 = vmatpush1.xpose.msra.mxu0 0.0
        %1349 = vmatprep.subr.mxu0 0.0
        %1350 = vmatpush1.xpose.msra.mxu0 0.0
        %1351 = vmatprep.subr.mxu0 0.0
        %1352 = vmatpush1.xpose.msra.mxu0 0.0
        %1353 = vmatprep.subr.mxu0 0.0
        %1354 = vmatpush1.xpose.msra.mxu0 0.0
        %1355 = vmatprep.subr.mxu0 0.0
        %1356 = vmatpush1.xpose.msra.mxu0 0.0
        %1357 = vmatprep.subr.mxu0 0.0
        %1358 = vmatpush1.xpose.msra.mxu0 0.0
        %1359 = vmatprep.subr.mxu0 0.0
        %1360 = vmatpush1.xpose.msra.mxu0 0.0
        %1361 = vmatprep.subr.mxu0 0.0
        %1362 = vmatpush1.xpose.msra.mxu0 0.0
        %1363 = vmatprep.subr.mxu0 0.0
        %1364 = vmatpush1.xpose.msra.mxu0 0.0
        %1365 = vmatprep.subr.mxu0 0.0
        %1366 = vmatpush1.xpose.msra.mxu0 0.0
        %1367 = vmatprep.mubr.f32.mxu0 0.0
        %1368 = vmatmul.mubr.f32.gmra.mrb[0].mxu0 %v1299
        %v1369 = vpop.f32.mrb[0].mxu0
        %v1370 = vadd.f32 0.0, %v1369
        %v1371 = vpop.f32.mrb[0].mxu0
        %1372 = vdwg.mxu0
        %v1373 = vmul.f32 %v1370, 0.25
        %v1374 = vsel %vm877, %v1373, -inf
        %1375 = vmax.xlane.f32.xlu0 %v1374
        %v1376 = vpop.xlane.xlu0 %1375
        %v1377 = vsub.f32 %v1373, %v1376
        %v1378 = vmul.f32 %v1377, 1.442695
        %v1379 = vpow.pop %v1378
        %v1380 = vsel %vm877, %v1379, 0.0
        %1381 = vadd.xlane.f32.xlu0 %v1380
        %v1382 = vpop.xlane.xlu0 %1381
        %v1383 = vrcp.pop %v1382
        %v1384 = vmul.f32 %v1379, %v1383
        %1385 = vrot.lane.b32.xlu0 %v796, 80
        %v1386 = vpop.permute.xlu0 %1385
        %v1389 = vsel %vm877, %v1384, 0
        %1391 = vmatprep.subr.mxu0 0.0
        %1392 = vmatpush1.msra.mxu0 %v1386
        %1393 = vmatprep.subr.mxu0 0.0
        %1394 = vmatpush1.msra.mxu0 0.0
        %1395 = vmatprep.subr.mxu0 0.0
        %1396 = vmatpush1.msra.mxu0 0.0
        %1397 = vmatprep.subr.mxu0 0.0
        %1398 = vmatpush1.msra.mxu0 0.0
        %1399 = vmatprep.subr.mxu0 0.0
        %1400 = vmatpush1.msra.mxu0 0.0
        %1401 = vmatprep.subr.mxu0 0.0
        %1402 = vmatpush1.msra.mxu0 0.0
        %1403 = vmatprep.subr.mxu0 0.0
        %1404 = vmatpush1.msra.mxu0 0.0
        %1405 = vmatprep.subr.mxu0 0.0
        %1406 = vmatpush1.msra.mxu0 0.0
        %1407 = vmatprep.subr.mxu0 0.0
        %1408 = vmatpush1.msra.mxu0 0.0
        %1409 = vmatprep.subr.mxu0 0.0
        %1410 = vmatpush1.msra.mxu0 0.0
        %1411 = vmatprep.subr.mxu0 0.0
        %1412 = vmatpush1.msra.mxu0 0.0
        %1413 = vmatprep.subr.mxu0 0.0
        %1414 = vmatpush1.msra.mxu0 0.0
        %1415 = vmatprep.subr.mxu0 0.0
        %1416 = vmatpush1.msra.mxu0 0.0
        %1417 = vmatprep.subr.mxu0 0.0
        %1418 = vmatpush1.msra.mxu0 0.0
        %1419 = vmatprep.subr.mxu0 0.0
        %1420 = vmatpush1.msra.mxu0 0.0
        %1421 = vmatprep.subr.mxu0 0.0
        %1422 = vmatpush1.msra.mxu0 0.0
        %1423 = vmatprep.subr.mxu0 0.0
        %1424 = vmatpush1.msra.mxu0 0.0
        %1425 = vmatprep.subr.mxu0 0.0
        %1426 = vmatpush1.msra.mxu0 0.0
        %1427 = vmatprep.subr.mxu0 0.0
        %1428 = vmatpush1.msra.mxu0 0.0
        %1429 = vmatprep.subr.mxu0 0.0
        %1430 = vmatpush1.msra.mxu0 0.0
        %1431 = vmatprep.subr.mxu0 0.0
        %1432 = vmatpush1.msra.mxu0 0.0
        %1433 = vmatprep.subr.mxu0 0.0
        %1434 = vmatpush1.msra.mxu0 0.0
        %1435 = vmatprep.subr.mxu0 0.0
        %1436 = vmatpush1.msra.mxu0 0.0
        %1437 = vmatprep.subr.mxu0 0.0
        %1438 = vmatpush1.msra.mxu0 0.0
        %1439 = vmatprep.subr.mxu0 0.0
        %1440 = vmatpush1.msra.mxu0 0.0
        %1441 = vmatprep.subr.mxu0 0.0
        %1442 = vmatpush1.msra.mxu0 0.0
        %1443 = vmatprep.subr.mxu0 0.0
        %1444 = vmatpush1.msra.mxu0 0.0
        %1445 = vmatprep.subr.mxu0 0.0
        %1446 = vmatpush1.msra.mxu0 0.0
        %1447 = vmatprep.subr.mxu0 0.0
        %1448 = vmatpush1.msra.mxu0 0.0
        %1449 = vmatprep.subr.mxu0 0.0
        %1450 = vmatpush1.msra.mxu0 0.0
        %1451 = vmatprep.subr.mxu0 0.0
        %1452 = vmatpush1.msra.mxu0 0.0
        %1453 = vmatprep.subr.mxu0 0.0
        %1454 = vmatpush1.msra.mxu0 0.0
        %1455 = vmatprep.mubr.f32.mxu0 0.0
        %1456 = vmatmul.mubr.f32.gmra.mrb[0].mxu0 %v1389
        %v1457 = vpop.f32.mrb[0].mxu0
        %v1458 = vadd.f32 0.0, %v1457
        %v1459 = vpop.f32.mrb[0].mxu0
        %1460 = vdwg.mxu0
        %1462 = vrot.lane.b32.xlu0 %v1126, 16
        %v1463 = vpop.permute.xlu0 %1462
        %1466 = vrot.lane.b32.xlu0 %v1292, 32
        %v1467 = vpop.permute.xlu0 %1466
        %1470 = vrot.lane.b32.xlu0 %v1458, 48
        %v1471 = vpop.permute.xlu0 %1470
        %v1473 = vsel %vm799, %v959, %v1463
        %vm1474 = vcmask 261120
        %v1475 = vsel %vm1474, %v1473, %v1467
        %vm1476 = vcmask 392192
        %v1477 = vsel %vm1476, %v1475, %v1471
        %v1478 = vld [vmem:[#allocation13] sm:$0xff]
        %v1479 = vld [vmem:[#allocation13 + $0x8] sm:$0xff]
        %v1480 = vld [vmem:[#allocation13 + $0x10] sm:$0xff]
        %v1481 = vld [vmem:[#allocation13 + $0x18] sm:$0xff]
        %v1482 = vld [vmem:[#allocation13 + $0x20] sm:$0xff]
        %v1483 = vld [vmem:[#allocation13 + $0x28] sm:$0xff]
        %v1484 = vld [vmem:[#allocation13 + $0x30] sm:$0xff]
        %v1485 = vld [vmem:[#allocation13 + $0x38] sm:$0xff]
        %v1486 = vld [vmem:[%s10] sm:$0x1]
        %v1488 = vlaneseq
        %v1489 = vshrl.u32 %v1488, 7
        %v1490 = vsub.s32 0, %v1489
        %v1491 = vrot.slane %v1486, %v1490
        %v1494 = vsel %vm549, %v1477, 0
        %1496 = vmatprep.subr.mxu0 0.0
        %1497 = vmatpush1.msra.mxu0 %v1478
        %1498 = vmatprep.subr.mxu0 0.0
        %1499 = vmatpush1.msra.mxu0 %v1479
        %1500 = vmatprep.subr.mxu0 0.0
        %1501 = vmatpush1.msra.mxu0 %v1480
        %1502 = vmatprep.subr.mxu0 0.0
        %1503 = vmatpush1.msra.mxu0 %v1481
        %1504 = vmatprep.subr.mxu0 0.0
        %1505 = vmatpush1.msra.mxu0 %v1482
        %1506 = vmatprep.subr.mxu0 0.0
        %1507 = vmatpush1.msra.mxu0 %v1483
        %1508 = vmatprep.subr.mxu0 0.0
        %1509 = vmatpush1.msra.mxu0 %v1484
        %1510 = vmatprep.subr.mxu0 0.0
        %1511 = vmatpush1.msra.mxu0 %v1485
        %1512 = vmatprep.subr.mxu0 0.0
        %1513 = vmatpush1.msra.mxu0 0.0
        %1514 = vmatprep.subr.mxu0 0.0
        %1515 = vmatpush1.msra.mxu0 0.0
        %1516 = vmatprep.subr.mxu0 0.0
        %1517 = vmatpush1.msra.mxu0 0.0
        %1518 = vmatprep.subr.mxu0 0.0
        %1519 = vmatpush1.msra.mxu0 0.0
        %1520 = vmatprep.subr.mxu0 0.0
        %1521 = vmatpush1.msra.mxu0 0.0
        %1522 = vmatprep.subr.mxu0 0.0
        %1523 = vmatpush1.msra.mxu0 0.0
        %1524 = vmatprep.subr.mxu0 0.0
        %1525 = vmatpush1.msra.mxu0 0.0
        %1526 = vmatprep.subr.mxu0 0.0
        %1527 = vmatpush1.msra.mxu0 0.0
        %1528 = vmatprep.subr.mxu0 0.0
        %1529 = vmatpush1.msra.mxu0 0.0
        %1530 = vmatprep.subr.mxu0 0.0
        %1531 = vmatpush1.msra.mxu0 0.0
        %1532 = vmatprep.subr.mxu0 0.0
        %1533 = vmatpush1.msra.mxu0 0.0
        %1534 = vmatprep.subr.mxu0 0.0
        %1535 = vmatpush1.msra.mxu0 0.0
        %1536 = vmatprep.subr.mxu0 0.0
        %1537 = vmatpush1.msra.mxu0 0.0
        %1538 = vmatprep.subr.mxu0 0.0
        %1539 = vmatpush1.msra.mxu0 0.0
        %1540 = vmatprep.subr.mxu0 0.0
        %1541 = vmatpush1.msra.mxu0 0.0
        %1542 = vmatprep.subr.mxu0 0.0
        %1543 = vmatpush1.msra.mxu0 0.0
        %1544 = vmatprep.subr.mxu0 0.0
        %1545 = vmatpush1.msra.mxu0 0.0
        %1546 = vmatprep.subr.mxu0 0.0
        %1547 = vmatpush1.msra.mxu0 0.0
        %1548 = vmatprep.subr.mxu0 0.0
        %1549 = vmatpush1.msra.mxu0 0.0
        %1550 = vmatprep.subr.mxu0 0.0
        %1551 = vmatpush1.msra.mxu0 0.0
        %1552 = vmatprep.subr.mxu0 0.0
        %1553 = vmatpush1.msra.mxu0 0.0
        %1554 = vmatprep.subr.mxu0 0.0
        %1555 = vmatpush1.msra.mxu0 0.0
        %1556 = vmatprep.subr.mxu0 0.0
        %1557 = vmatpush1.msra.mxu0 0.0
        %1558 = vmatprep.subr.mxu0 0.0
        %1559 = vmatpush1.msra.mxu0 0.0
        %1560 = vmatprep.mubr.f32.mxu0 0.0
        %1561 = vmatmul.mubr.f32.gmra.mrb[0].mxu0 %v1494
        %v1562 = vpop.f32.mrb[0].mxu0
        %v1563 = vadd.f32 %v1491, %v1562
        %v1564 = vpop.f32.mrb[0].mxu0
        %1565 = vdwg.mxu0
        %1566 = vst.msk [vmem:[%s530] sm:$0xff] %vm549, %v1563
        %s1567 = sand.u32 %s287, 1
        %s1568 = scalar_lea.sflag [#allocation4], %s1567
        %s1569 = sand.u32 %s287, 1
        %s1570 = smul.addr %s1569, 8
        %s1571 = scalar_lea.vmem [#allocation14], %s1570
        // Predicated region
        $region93: #{tpu_custom_call.1} parent=63 // pred_check
          %p1572 = pneg %p297
        $region94: #{tpu_custom_call.1} parent=63 // pred_check_branch
          %1574 = sbr.rel (%p1572) target = $region96
        $region95: #{tpu_custom_call.1} parent=63 // pred_region
          %s1576 = ssub.s32 128, 128
          %1577 = vsyncadd %s1568, %s1576
          %s1578 = smul.addr %s33, 128
          %s1579 = scalar_lea.hbm %s11, %s1578
          %s1581 = sshll.u32 %s1571, 4
          %s1582 = int_to_ptr.vmem [resolvable:$true] %s1581
          %1584 = dma.vmem_to_hbm [thread:$0]  %s1582, 128, %s1579, %s1568
        $region96: #{tpu_custom_call.1} parent=63 // pred_fallthru
          _
      $region64: #{tpu_custom_call.1} parent=5 // pred_fallthru
        _
      %p1585 = scmp.le.s32.totalorder 2, %s28
      // Predicated region
      $region97: #{tpu_custom_call.1} parent=5 // pred_check
        %p1586 = pneg %p1585
      $region98: #{tpu_custom_call.1} parent=5 // pred_check_branch
        %1588 = sbr.rel (%p1586) target = $region100
      $region99: #{tpu_custom_call.1} parent=5 // pred_region
        %s1589 = ssub.s32 %s28, 2
        // Predicated region
        $region101: #{tpu_custom_call.1} parent=99 // pred_check
          %p1590 = pneg %p303
        $region102: #{tpu_custom_call.1} parent=99 // pred_check_branch
          %1592 = sbr.rel (%p1590) target = $region104
        $region103: #{tpu_custom_call.1} parent=99 // pred_region
          %s1593 = sand.u32 %s288, 1
          %s1594 = scalar_lea.sflag [#allocation4], %s1593
          %s1595 = sand.u32 %s288, 1
          %s1596 = smul.addr %s1595, 8
          %s1597 = scalar_lea.vmem [#allocation14], %s1596
          %1598 = dma.done %s1594, 128
        $region104: #{tpu_custom_call.1} parent=99 // pred_fallthru
          _
      $region100: #{tpu_custom_call.1} parent=5 // pred_fallthru
        _
    $region6: #{tpu_custom_call.1} parent=1 // loop_footer
      %s32 = sadd.s32 1, %s28
    $region7: #{tpu_custom_call.1} parent=1 // loop_footer_branch
      %27 = sbr.rel target = $region3
    $region8: #{tpu_custom_call.1} parent=1 // loop_exit
      _
    %1599 = vsyncpa [#allocation3], 1
    %s1600 = scalar_lea.sflag [#allocation3], 1
    %1601 = vsyncpa %s1600, 1
    %1602 = vsyncpa [#allocation6], 1
    %s1603 = scalar_lea.sflag [#allocation6], 1
    %1604 = vsyncpa %s1603, 1
    %1605 = vsyncpa [#allocation9], 1
    %1606 = vsyncpa [#allocation12], 1
    %1607 = vsyncpa [#allocation4], 1
    %s1608 = scalar_lea.sflag [#allocation4], 1
    %1609 = vsyncpa %s1608, 1

</llo_original>
